<compile_context>
chip_gen: v6e
topology: v6e:2x2x1
jax: 0.10.0
libtpu: 0.0.40
codegen_flags: <defaults>
</compile_context>

<pallas_src>
import jax
import jax.numpy as jnp
from jax.experimental import pallas as pl
from jax.experimental.pallas import tpu as pltpu

HIDDEN_SIZE = 32     # hidden_size (PyTorch script uses 256; small for the demo)
OUTPUT_SIZE = 16     # output_size (vocab)
SEQ_LEN = 8          # number of fused decode steps


def decoder_kernel(tok_ref,     # (T,)  int32 in SMEM (scalar prefetch)
                   emb_ref,     # (V,1,H) full embedding table, resident in VMEM
                   hid0_ref,    # (1,H)   initial hidden
                   w_gru_ref,   # (2H,4H) fused GRU weight [x;h] -> [r | z | n_in | n_hid]
                   b_gru_ref,   # (1,4H)  fused GRU bias (r/z biases pre-summed)
                   w_out_ref,   # (H,VP)  output projection, pre-transposed, vocab lane-padded
                   b_out_ref,   # (1,VP)  output bias, pad columns = -1e30
                   logp_ref,    # (T,VP)  all per-step log-probs (out, single store)
                   hfin_ref):   # (1,H)   final hidden (out, single store)
    f32 = jnp.float32
    H = hid0_ref.shape[1]
    T = logp_ref.shape[0]

    # Weights loaded once; everything below stays in vregs.
    w_gru = w_gru_ref[...]
    b_gru = b_gru_ref[...]
    w_out = w_out_ref[...]
    b_out = b_out_ref[...]

    h = hid0_ref[...]                                   # (1, H) hidden carry (vregs)
    rows = []

    # Static in-kernel time loop (T is a trace-time constant) — no per-step grid overhead.
    for t in range(T):
        tok = tok_ref[t]                                # scalar SMEM read
        x = jnp.maximum(emb_ref[tok], 0.0)              # relu(embedding(input))  (1, H)

        # --- fused GRU step: one MXU push for all gates ---
        xh = jnp.concatenate([x, h], axis=1)            # (1, 2H)
        g = jnp.dot(xh, w_gru, preferred_element_type=f32) + b_gru   # (1, 4H)
        r = jax.nn.sigmoid(g[:, 0:H])
        z = jax.nn.sigmoid(g[:, H:2 * H])
        n = jnp.tanh(g[:, 2 * H:3 * H] + r * g[:, 3 * H:4 * H])
        h = (1.0 - z) * n + z * h                       # (1, H)

        # --- out projection + log_softmax over the lane-padded vocab (pads at -1e30 exact) ---
        logits = jnp.dot(h, w_out, preferred_element_type=f32) + b_out   # (1, VP)
        m = jnp.max(logits, axis=1, keepdims=True)
        shifted = logits - m
        lse = jnp.log(jnp.sum(jnp.exp(shifted), axis=1, keepdims=True))
        rows.append(shifted - lse)

    logp_ref[...] = jnp.concatenate(rows, axis=0)       # one (T, VP) lane-dense store
    hfin_ref[...] = h                                   # final hidden written once


def make_params(key, hidden_size=HIDDEN_SIZE, output_size=OUTPUT_SIZE):
    """PyTorch-layout parameters for DecoderRNN."""
    H, V = hidden_size, output_size
    ks = jax.random.split(key, 7)
    s = 0.1
    return {
        "embedding": jax.random.normal(ks[0], (V, H), jnp.float32) * s,     # nn.Embedding(V, H)
        "w_ih":      jax.random.normal(ks[1], (3 * H, H), jnp.float32) * s,  # GRU weight_ih_l0 (r,z,n)
        "b_ih":      jax.random.normal(ks[2], (1, 3 * H), jnp.float32) * s,
        "w_hh":      jax.random.normal(ks[3], (3 * H, H), jnp.float32) * s,  # GRU weight_hh_l0 (r,z,n)
        "b_hh":      jax.random.normal(ks[4], (1, 3 * H), jnp.float32) * s,
        "w_out":     jax.random.normal(ks[5], (V, H), jnp.float32) * s,      # nn.Linear(H, V)
        "b_out":     jax.random.normal(ks[6], (1, V), jnp.float32) * s,
    }


def _pack_params(params):
    """One-time host-side repack: fused (2H,4H) GRU slab, (in,out) layouts, lane-padded vocab."""
    H = params["w_out"].shape[1]
    V = params["w_out"].shape[0]
    vp = ((V + 127) // 128) * 128

    emb3 = params["embedding"].reshape(V, 1, H)                       # (V,1,H) for in-kernel row gather

    w_ih, w_hh = params["w_ih"], params["w_hh"]
    b_ih, b_hh = params["b_ih"], params["b_hh"]
    # Fused weight: rows [x ; h] (2H), cols [r | z | n_in | n_hid] (4H).
    w_fused = jnp.zeros((2 * H, 4 * H), jnp.float32)
    w_fused = w_fused.at[0:H,       0:H        ].set(w_ih[0:H].T)          # ih_r
    w_fused = w_fused.at[0:H,       H:2 * H    ].set(w_ih[H:2 * H].T)      # ih_z
    w_fused = w_fused.at[0:H,       2 * H:3 * H].set(w_ih[2 * H:3 * H].T)  # ih_n
    w_fused = w_fused.at[H:2 * H,   0:H        ].set(w_hh[0:H].T)          # hh_r
    w_fused = w_fused.at[H:2 * H,   H:2 * H    ].set(w_hh[H:2 * H].T)      # hh_z
    w_fused = w_fused.at[H:2 * H,   3 * H:4 * H].set(w_hh[2 * H:3 * H].T)  # hh_n
    b_fused = jnp.concatenate(
        [b_ih[:, 0:H] + b_hh[:, 0:H],           # r
         b_ih[:, H:2 * H] + b_hh[:, H:2 * H],   # z
         b_ih[:, 2 * H:3 * H],                  # n (input part)
         b_hh[:, 2 * H:3 * H]], axis=1)         # n (hidden part)  -> (1, 4H)

    w_out_p = jnp.zeros((H, vp), jnp.float32).at[:, :V].set(params["w_out"].T)
    b_out_p = jnp.full((1, vp), -1e30, jnp.float32).at[:, :V].set(params["b_out"])
    return emb3, w_fused, b_fused, w_out_p, b_out_p, vp


def decoder_rnn_decode(params, tokens, hidden0):
    """Run T DecoderRNN.forward steps fused in one pallas_call (single grid step).

    tokens:  int32 (T,) token indices (one per step)
    hidden0: float32 (1, 1, H)
    returns: (log_probs (T, V), final hidden (1, 1, H))
    """
    H = params["w_out"].shape[1]
    V = params["w_out"].shape[0]
    T = tokens.shape[0]
    emb3, w_gru, b_gru, w_out_p, b_out_p, vp = _pack_params(params)
    hid0 = hidden0.reshape(1, H)

    grid_spec = pltpu.PrefetchScalarGridSpec(
        num_scalar_prefetch=1,          # tokens -> SMEM, readable as scalars in-kernel
        grid=(1,),                      # single step; the T loop lives inside the kernel
        in_specs=[
            pl.BlockSpec((V, 1, H),     lambda i, tok: (0, 0, 0)),   # embedding table (resident)
            pl.BlockSpec((1, H),        lambda i, tok: (0, 0)),      # initial hidden
            pl.BlockSpec((2 * H, 4 * H), lambda i, tok: (0, 0)),     # fused GRU weight (resident)
            pl.BlockSpec((1, 4 * H),    lambda i, tok: (0, 0)),      # fused GRU bias (resident)
            pl.BlockSpec((H, vp),       lambda i, tok: (0, 0)),      # out projection (resident)
            pl.BlockSpec((1, vp),       lambda i, tok: (0, 0)),      # out bias (resident)
        ],
        out_specs=(
            pl.BlockSpec((T, vp), lambda i, tok: (0, 0)),            # all log-probs, one slab
            pl.BlockSpec((1, H),  lambda i, tok: (0, 0)),            # final hidden
        ),
    )

    logp_p, h_fin = pl.pallas_call(
        decoder_kernel,
        grid_spec=grid_spec,
        out_shape=(jax.ShapeDtypeStruct((T, vp), jnp.float32),
                   jax.ShapeDtypeStruct((1, H), jnp.float32)),
        compiler_params=pltpu.CompilerParams(dimension_semantics=("arbitrary",)),
    )(tokens.astype(jnp.int32), emb3, hid0, w_gru, b_gru, w_out_p, b_out_p)

    return logp_p[:, :V], h_fin.reshape(1, 1, H)


def decoder_rnn_forward(params, input_token, hidden):
    """Mirrors DecoderRNN.forward(input, hidden): one step == T=1 fused decode."""
    tok = input_token.reshape(-1).astype(jnp.int32)       # (1,)
    logp, h_new = decoder_rnn_decode(params, tok, hidden)
    return logp, h_new                                    # (1, V), (1, 1, H)


def reference_decode(params, tokens, hidden0):
    """Pure-JAX reference (PyTorch semantics) for correctness checking."""
    H = params["w_out"].shape[1]

    def step(h, tok):
        x = jnp.maximum(params["embedding"][tok], 0.0).reshape(1, H)
        gi = x @ params["w_ih"].T + params["b_ih"]
        gh = h @ params["w_hh"].T + params["b_hh"]
        r = jax.nn.sigmoid(gi[:, :H] + gh[:, :H])
        z = jax.nn.sigmoid(gi[:, H:2 * H] + gh[:, H:2 * H])
        n = jnp.tanh(gi[:, 2 * H:] + r * gh[:, 2 * H:])
        h_new = (1.0 - z) * n + z * h
        logits = h_new @ params["w_out"].T + params["b_out"]
        logp = logits - jax.scipy.special.logsumexp(logits, axis=1, keepdims=True)
        return h_new, logp[0]

    h_fin, logps = jax.lax.scan(step, hidden0.reshape(1, H), tokens)
    return logps, h_fin.reshape(1, 1, H)


if __name__ == "__main__":
    key = jax.random.PRNGKey(0)
    k_params, k_tok = jax.random.split(key)

    params = make_params(k_params)
    tokens = jax.random.randint(k_tok, (SEQ_LEN,), 0, OUTPUT_SIZE, dtype=jnp.int32)
    hidden0 = jnp.zeros((1, 1, HIDDEN_SIZE), jnp.float32)            # initHidden()

    # fused multi-step decode (one pallas_call, single grid step, in-kernel time loop)
    log_probs, h_final = decoder_rnn_decode(params, tokens, hidden0)
    jax.block_until_ready((log_probs, h_final))

    assert log_probs.shape == (SEQ_LEN, OUTPUT_SIZE)
    assert h_final.shape == (1, 1, HIDDEN_SIZE)

    ref_lp, ref_h = reference_decode(params, tokens, hidden0)
    assert jnp.allclose(log_probs, ref_lp, atol=2e-2, rtol=2e-2)
    assert jnp.allclose(h_final, ref_h, atol=2e-2, rtol=2e-2)

    # single-step call matching the original forward(input, hidden) signature
    lp1, h1 = decoder_rnn_forward(params, jnp.array([[3]], dtype=jnp.int32), hidden0)
    jax.block_until_ready((lp1, h1))
    assert lp1.shape == (1, OUTPUT_SIZE) and h1.shape == (1, 1, HIDDEN_SIZE)

    print("KERNEL_OK")
</pallas_src>

<mosaic_0001>
module attributes {stable_mosaic.version = 11 : i64} {
  func.func @decoder_kernel(%arg0: i32, %arg1: memref<8xi32, #tpu.memory_space<smem>>, %arg2: memref<16x1x32xf32, #tpu.memory_space<vmem>>, %arg3: memref<1x32xf32, #tpu.memory_space<vmem>>, %arg4: memref<64x128xf32, #tpu.memory_space<vmem>>, %arg5: memref<1x128xf32, #tpu.memory_space<vmem>>, %arg6: memref<32x128xf32, #tpu.memory_space<vmem>>, %arg7: memref<1x128xf32, #tpu.memory_space<vmem>>, %arg8: memref<8x128xf32, #tpu.memory_space<vmem>>, %arg9: memref<1x32xf32, #tpu.memory_space<vmem>>) attributes {dimension_semantics = [#tpu.dimension_semantics<arbitrary>], iteration_bounds = array<i64: 1>, scalar_prefetch = 1 : i64, scratch_operands = 0 : i64, tpu.core_type = #tpu.core_type<tc>, window_params = [{pipeline_mode = #tpu.pipeline_mode<synchronous>, transform_indices = @transform_0, window_bounds = array<i64: 16, 1, 32>}, {pipeline_mode = #tpu.pipeline_mode<synchronous>, transform_indices = @transform_1, window_bounds = array<i64: 1, 32>}, {pipeline_mode = #tpu.pipeline_mode<synchronous>, transform_indices = @transform_2, window_bounds = array<i64: 64, 128>}, {pipeline_mode = #tpu.pipeline_mode<synchronous>, transform_indices = @transform_3, window_bounds = array<i64: 1, 128>}, {pipeline_mode = #tpu.pipeline_mode<synchronous>, transform_indices = @transform_4, window_bounds = array<i64: 32, 128>}, {pipeline_mode = #tpu.pipeline_mode<synchronous>, transform_indices = @transform_5, window_bounds = array<i64: 1, 128>}, {pipeline_mode = #tpu.pipeline_mode<synchronous>, transform_indices = @transform_6, window_bounds = array<i64: 8, 128>}, {pipeline_mode = #tpu.pipeline_mode<synchronous>, transform_indices = @transform_7, window_bounds = array<i64: 1, 32>}]} {
    %c0 = arith.constant 0 : index
    %c0_0 = arith.constant 0 : index
    %0 = vector.load %arg4[%c0, %c0_0] : memref<64x128xf32, #tpu.memory_space<vmem>>, vector<64x128xf32>
    %c0_1 = arith.constant 0 : index
    %c0_2 = arith.constant 0 : index
    %1 = vector.load %arg5[%c0_1, %c0_2] : memref<1x128xf32, #tpu.memory_space<vmem>>, vector<1x128xf32>
    %c0_3 = arith.constant 0 : index
    %c0_4 = arith.constant 0 : index
    %2 = vector.load %arg6[%c0_3, %c0_4] : memref<32x128xf32, #tpu.memory_space<vmem>>, vector<32x128xf32>
    %c0_5 = arith.constant 0 : index
    %c0_6 = arith.constant 0 : index
    %3 = vector.load %arg7[%c0_5, %c0_6] : memref<1x128xf32, #tpu.memory_space<vmem>>, vector<1x128xf32>
    %c0_7 = arith.constant 0 : index
    %c0_8 = arith.constant 0 : index
    %4 = vector.load %arg3[%c0_7, %c0_8] : memref<1x32xf32, #tpu.memory_space<vmem>>, vector<1x32xf32>
    %c0_9 = arith.constant 0 : index
    %5 = memref.load %arg1[%c0_9] : memref<8xi32, #tpu.memory_space<smem>>
    %6 = arith.index_cast %5 : i32 to index
    %c0_10 = arith.constant 0 : index
    %c0_11 = arith.constant 0 : index
    %7 = vector.load %arg2[%6, %c0_10, %c0_11] : memref<16x1x32xf32, #tpu.memory_space<vmem>>, vector<1x1x32xf32>
    %8 = vector.shape_cast %7 : vector<1x1x32xf32> to vector<1x32xf32>
    %cst = arith.constant 0.000000e+00 : f32
    %9 = vector.broadcast %cst : f32 to vector<1x32xf32>
    %10 = arith.maximumf %8, %9 : vector<1x32xf32>
    %11 = tpu.concatenate %10, %4 in 1 : vector<1x32xf32>, vector<1x32xf32> -> vector<1x64xf32>
    %cst_12 = arith.constant dense<0.000000e+00> : vector<1x128xf32>
    %12 = tpu.matmul %11, %0, %cst_12 {dimension_numbers = #tpu.dot_dimension_numbers<[1], [0], [0], [1], [0, 0, 1, 1], [], []>} : vector<1x64xf32>, vector<64x128xf32>, vector<1x128xf32> -> vector<1x128xf32>
    %13 = arith.addf %12, %1 : vector<1x128xf32>
    %14 = vector.extract_strided_slice %13 {offsets = [0, 0], sizes = [1, 32], strides = [1, 1]} : vector<1x128xf32> to vector<1x32xf32>
    %15 = arith.negf %14 : vector<1x32xf32>
    %16 = math.exp %15 : vector<1x32xf32>
    %cst_13 = arith.constant 1.000000e+00 : f32
    %17 = vector.broadcast %cst_13 : f32 to vector<1x32xf32>
    %18 = arith.addf %17, %16 : vector<1x32xf32>
    %19 = arith.divf %17, %18 : vector<1x32xf32>
    %20 = vector.extract_strided_slice %13 {offsets = [0, 32], sizes = [1, 32], strides = [1, 1]} : vector<1x128xf32> to vector<1x32xf32>
    %21 = arith.negf %20 : vector<1x32xf32>
    %22 = math.exp %21 : vector<1x32xf32>
    %cst_14 = arith.constant 1.000000e+00 : f32
    %23 = vector.broadcast %cst_14 : f32 to vector<1x32xf32>
    %24 = arith.addf %23, %22 : vector<1x32xf32>
    %25 = arith.divf %23, %24 : vector<1x32xf32>
    %26 = vector.extract_strided_slice %13 {offsets = [0, 64], sizes = [1, 32], strides = [1, 1]} : vector<1x128xf32> to vector<1x32xf32>
    %27 = vector.extract_strided_slice %13 {offsets = [0, 96], sizes = [1, 32], strides = [1, 1]} : vector<1x128xf32> to vector<1x32xf32>
    %28 = arith.mulf %19, %27 : vector<1x32xf32>
    %29 = arith.addf %26, %28 : vector<1x32xf32>
    %30 = math.tanh %29 : vector<1x32xf32>
    %cst_15 = arith.constant 1.000000e+00 : f32
    %31 = vector.broadcast %cst_15 : f32 to vector<1x32xf32>
    %32 = arith.subf %31, %25 : vector<1x32xf32>
    %33 = arith.mulf %32, %30 : vector<1x32xf32>
    %34 = arith.mulf %25, %4 : vector<1x32xf32>
    %35 = arith.addf %33, %34 : vector<1x32xf32>
    %cst_16 = arith.constant dense<0.000000e+00> : vector<1x128xf32>
    %36 = tpu.matmul %35, %2, %cst_16 {dimension_numbers = #tpu.dot_dimension_numbers<[1], [0], [0], [1], [0, 0, 1, 1], [], []>} : vector<1x32xf32>, vector<32x128xf32>, vector<1x128xf32> -> vector<1x128xf32>
    %37 = arith.addf %36, %3 : vector<1x128xf32>
    %cst_17 = arith.constant dense<0xFF800000> : vector<1xf32>
    %38 = vector.multi_reduction <maximumf>, %37, %cst_17 [1] : vector<1x128xf32> to vector<1xf32>
    %39 = vector.shape_cast %38 : vector<1xf32> to vector<1x1xf32>
    %40 = vector.broadcast %39 : vector<1x1xf32> to vector<1x128xf32>
    %41 = arith.subf %37, %40 : vector<1x128xf32>
    %42 = math.exp %41 : vector<1x128xf32>
    %cst_18 = arith.constant dense<0.000000e+00> : vector<1xf32>
    %43 = vector.multi_reduction <add>, %42, %cst_18 [1] : vector<1x128xf32> to vector<1xf32>
    %44 = vector.shape_cast %43 : vector<1xf32> to vector<1x1xf32>
    %45 = math.log %44 : vector<1x1xf32>
    %46 = vector.broadcast %45 : vector<1x1xf32> to vector<1x128xf32>
    %47 = arith.subf %41, %46 : vector<1x128xf32>
    %c1 = arith.constant 1 : index
    %48 = memref.load %arg1[%c1] : memref<8xi32, #tpu.memory_space<smem>>
    %49 = arith.index_cast %48 : i32 to index
    %c0_19 = arith.constant 0 : index
    %c0_20 = arith.constant 0 : index
    %50 = vector.load %arg2[%49, %c0_19, %c0_20] : memref<16x1x32xf32, #tpu.memory_space<vmem>>, vector<1x1x32xf32>
    %51 = vector.shape_cast %50 : vector<1x1x32xf32> to vector<1x32xf32>
    %cst_21 = arith.constant 0.000000e+00 : f32
    %52 = vector.broadcast %cst_21 : f32 to vector<1x32xf32>
    %53 = arith.maximumf %51, %52 : vector<1x32xf32>
    %54 = tpu.concatenate %53, %35 in 1 : vector<1x32xf32>, vector<1x32xf32> -> vector<1x64xf32>
    %cst_22 = arith.constant dense<0.000000e+00> : vector<1x128xf32>
    %55 = tpu.matmul %54, %0, %cst_22 {dimension_numbers = #tpu.dot_dimension_numbers<[1], [0], [0], [1], [0, 0, 1, 1], [], []>} : vector<1x64xf32>, vector<64x128xf32>, vector<1x128xf32> -> vector<1x128xf32>
    %56 = arith.addf %55, %1 : vector<1x128xf32>
    %57 = vector.extract_strided_slice %56 {offsets = [0, 0], sizes = [1, 32], strides = [1, 1]} : vector<1x128xf32> to vector<1x32xf32>
    %58 = arith.negf %57 : vector<1x32xf32>
    %59 = math.exp %58 : vector<1x32xf32>
    %cst_23 = arith.constant 1.000000e+00 : f32
    %60 = vector.broadcast %cst_23 : f32 to vector<1x32xf32>
    %61 = arith.addf %60, %59 : vector<1x32xf32>
    %62 = arith.divf %60, %61 : vector<1x32xf32>
    %63 = vector.extract_strided_slice %56 {offsets = [0, 32], sizes = [1, 32], strides = [1, 1]} : vector<1x128xf32> to vector<1x32xf32>
    %64 = arith.negf %63 : vector<1x32xf32>
    %65 = math.exp %64 : vector<1x32xf32>
    %cst_24 = arith.constant 1.000000e+00 : f32
    %66 = vector.broadcast %cst_24 : f32 to vector<1x32xf32>
    %67 = arith.addf %66, %65 : vector<1x32xf32>
    %68 = arith.divf %66, %67 : vector<1x32xf32>
    %69 = vector.extract_strided_slice %56 {offsets = [0, 64], sizes = [1, 32], strides = [1, 1]} : vector<1x128xf32> to vector<1x32xf32>
    %70 = vector.extract_strided_slice %56 {offsets = [0, 96], sizes = [1, 32], strides = [1, 1]} : vector<1x128xf32> to vector<1x32xf32>
    %71 = arith.mulf %62, %70 : vector<1x32xf32>
    %72 = arith.addf %69, %71 : vector<1x32xf32>
    %73 = math.tanh %72 : vector<1x32xf32>
    %cst_25 = arith.constant 1.000000e+00 : f32
    %74 = vector.broadcast %cst_25 : f32 to vector<1x32xf32>
    %75 = arith.subf %74, %68 : vector<1x32xf32>
    %76 = arith.mulf %75, %73 : vector<1x32xf32>
    %77 = arith.mulf %68, %35 : vector<1x32xf32>
    %78 = arith.addf %76, %77 : vector<1x32xf32>
    %cst_26 = arith.constant dense<0.000000e+00> : vector<1x128xf32>
    %79 = tpu.matmul %78, %2, %cst_26 {dimension_numbers = #tpu.dot_dimension_numbers<[1], [0], [0], [1], [0, 0, 1, 1], [], []>} : vector<1x32xf32>, vector<32x128xf32>, vector<1x128xf32> -> vector<1x128xf32>
    %80 = arith.addf %79, %3 : vector<1x128xf32>
    %cst_27 = arith.constant dense<0xFF800000> : vector<1xf32>
    %81 = vector.multi_reduction <maximumf>, %80, %cst_27 [1] : vector<1x128xf32> to vector<1xf32>
    %82 = vector.shape_cast %81 : vector<1xf32> to vector<1x1xf32>
    %83 = vector.broadcast %82 : vector<1x1xf32> to vector<1x128xf32>
    %84 = arith.subf %80, %83 : vector<1x128xf32>
    %85 = math.exp %84 : vector<1x128xf32>
    %cst_28 = arith.constant dense<0.000000e+00> : vector<1xf32>
    %86 = vector.multi_reduction <add>, %85, %cst_28 [1] : vector<1x128xf32> to vector<1xf32>
    %87 = vector.shape_cast %86 : vector<1xf32> to vector<1x1xf32>
    %88 = math.log %87 : vector<1x1xf32>
    %89 = vector.broadcast %88 : vector<1x1xf32> to vector<1x128xf32>
    %90 = arith.subf %84, %89 : vector<1x128xf32>
    %c2 = arith.constant 2 : index
    %91 = memref.load %arg1[%c2] : memref<8xi32, #tpu.memory_space<smem>>
    %92 = arith.index_cast %91 : i32 to index
    %c0_29 = arith.constant 0 : index
    %c0_30 = arith.constant 0 : index
    %93 = vector.load %arg2[%92, %c0_29, %c0_30] : memref<16x1x32xf32, #tpu.memory_space<vmem>>, vector<1x1x32xf32>
    %94 = vector.shape_cast %93 : vector<1x1x32xf32> to vector<1x32xf32>
    %cst_31 = arith.constant 0.000000e+00 : f32
    %95 = vector.broadcast %cst_31 : f32 to vector<1x32xf32>
    %96 = arith.maximumf %94, %95 : vector<1x32xf32>
    %97 = tpu.concatenate %96, %78 in 1 : vector<1x32xf32>, vector<1x32xf32> -> vector<1x64xf32>
    %cst_32 = arith.constant dense<0.000000e+00> : vector<1x128xf32>
    %98 = tpu.matmul %97, %0, %cst_32 {dimension_numbers = #tpu.dot_dimension_numbers<[1], [0], [0], [1], [0, 0, 1, 1], [], []>} : vector<1x64xf32>, vector<64x128xf32>, vector<1x128xf32> -> vector<1x128xf32>
    %99 = arith.addf %98, %1 : vector<1x128xf32>
    %100 = vector.extract_strided_slice %99 {offsets = [0, 0], sizes = [1, 32], strides = [1, 1]} : vector<1x128xf32> to vector<1x32xf32>
    %101 = arith.negf %100 : vector<1x32xf32>
    %102 = math.exp %101 : vector<1x32xf32>
    %cst_33 = arith.constant 1.000000e+00 : f32
    %103 = vector.broadcast %cst_33 : f32 to vector<1x32xf32>
    %104 = arith.addf %103, %102 : vector<1x32xf32>
    %105 = arith.divf %103, %104 : vector<1x32xf32>
    %106 = vector.extract_strided_slice %99 {offsets = [0, 32], sizes = [1, 32], strides = [1, 1]} : vector<1x128xf32> to vector<1x32xf32>
    %107 = arith.negf %106 : vector<1x32xf32>
    %108 = math.exp %107 : vector<1x32xf32>
    %cst_34 = arith.constant 1.000000e+00 : f32
    %109 = vector.broadcast %cst_34 : f32 to vector<1x32xf32>
    %110 = arith.addf %109, %108 : vector<1x32xf32>
    %111 = arith.divf %109, %110 : vector<1x32xf32>
    %112 = vector.extract_strided_slice %99 {offsets = [0, 64], sizes = [1, 32], strides = [1, 1]} : vector<1x128xf32> to vector<1x32xf32>
    %113 = vector.extract_strided_slice %99 {offsets = [0, 96], sizes = [1, 32], strides = [1, 1]} : vector<1x128xf32> to vector<1x32xf32>
    %114 = arith.mulf %105, %113 : vector<1x32xf32>
    %115 = arith.addf %112, %114 : vector<1x32xf32>
    %116 = math.tanh %115 : vector<1x32xf32>
    %cst_35 = arith.constant 1.000000e+00 : f32
    %117 = vector.broadcast %cst_35 : f32 to vector<1x32xf32>
    %118 = arith.subf %117, %111 : vector<1x32xf32>
    %119 = arith.mulf %118, %116 : vector<1x32xf32>
    %120 = arith.mulf %111, %78 : vector<1x32xf32>
    %121 = arith.addf %119, %120 : vector<1x32xf32>
    %cst_36 = arith.constant dense<0.000000e+00> : vector<1x128xf32>
    %122 = tpu.matmul %121, %2, %cst_36 {dimension_numbers = #tpu.dot_dimension_numbers<[1], [0], [0], [1], [0, 0, 1, 1], [], []>} : vector<1x32xf32>, vector<32x128xf32>, vector<1x128xf32> -> vector<1x128xf32>
    %123 = arith.addf %122, %3 : vector<1x128xf32>
    %cst_37 = arith.constant dense<0xFF800000> : vector<1xf32>
    %124 = vector.multi_reduction <maximumf>, %123, %cst_37 [1] : vector<1x128xf32> to vector<1xf32>
    %125 = vector.shape_cast %124 : vector<1xf32> to vector<1x1xf32>
    %126 = vector.broadcast %125 : vector<1x1xf32> to vector<1x128xf32>
    %127 = arith.subf %123, %126 : vector<1x128xf32>
    %128 = math.exp %127 : vector<1x128xf32>
    %cst_38 = arith.constant dense<0.000000e+00> : vector<1xf32>
    %129 = vector.multi_reduction <add>, %128, %cst_38 [1] : vector<1x128xf32> to vector<1xf32>
    %130 = vector.shape_cast %129 : vector<1xf32> to vector<1x1xf32>
    %131 = math.log %130 : vector<1x1xf32>
    %132 = vector.broadcast %131 : vector<1x1xf32> to vector<1x128xf32>
    %133 = arith.subf %127, %132 : vector<1x128xf32>
    %c3 = arith.constant 3 : index
    %134 = memref.load %arg1[%c3] : memref<8xi32, #tpu.memory_space<smem>>
    %135 = arith.index_cast %134 : i32 to index
    %c0_39 = arith.constant 0 : index
    %c0_40 = arith.constant 0 : index
    %136 = vector.load %arg2[%135, %c0_39, %c0_40] : memref<16x1x32xf32, #tpu.memory_space<vmem>>, vector<1x1x32xf32>
    %137 = vector.shape_cast %136 : vector<1x1x32xf32> to vector<1x32xf32>
    %cst_41 = arith.constant 0.000000e+00 : f32
    %138 = vector.broadcast %cst_41 : f32 to vector<1x32xf32>
    %139 = arith.maximumf %137, %138 : vector<1x32xf32>
    %140 = tpu.concatenate %139, %121 in 1 : vector<1x32xf32>, vector<1x32xf32> -> vector<1x64xf32>
    %cst_42 = arith.constant dense<0.000000e+00> : vector<1x128xf32>
    %141 = tpu.matmul %140, %0, %cst_42 {dimension_numbers = #tpu.dot_dimension_numbers<[1], [0], [0], [1], [0, 0, 1, 1], [], []>} : vector<1x64xf32>, vector<64x128xf32>, vector<1x128xf32> -> vector<1x128xf32>
    %142 = arith.addf %141, %1 : vector<1x128xf32>
    %143 = vector.extract_strided_slice %142 {offsets = [0, 0], sizes = [1, 32], strides = [1, 1]} : vector<1x128xf32> to vector<1x32xf32>
    %144 = arith.negf %143 : vector<1x32xf32>
    %145 = math.exp %144 : vector<1x32xf32>
    %cst_43 = arith.constant 1.000000e+00 : f32
    %146 = vector.broadcast %cst_43 : f32 to vector<1x32xf32>
    %147 = arith.addf %146, %145 : vector<1x32xf32>
    %148 = arith.divf %146, %147 : vector<1x32xf32>
    %149 = vector.extract_strided_slice %142 {offsets = [0, 32], sizes = [1, 32], strides = [1, 1]} : vector<1x128xf32> to vector<1x32xf32>
    %150 = arith.negf %149 : vector<1x32xf32>
    %151 = math.exp %150 : vector<1x32xf32>
    %cst_44 = arith.constant 1.000000e+00 : f32
    %152 = vector.broadcast %cst_44 : f32 to vector<1x32xf32>
    %153 = arith.addf %152, %151 : vector<1x32xf32>
    %154 = arith.divf %152, %153 : vector<1x32xf32>
    %155 = vector.extract_strided_slice %142 {offsets = [0, 64], sizes = [1, 32], strides = [1, 1]} : vector<1x128xf32> to vector<1x32xf32>
    %156 = vector.extract_strided_slice %142 {offsets = [0, 96], sizes = [1, 32], strides = [1, 1]} : vector<1x128xf32> to vector<1x32xf32>
    %157 = arith.mulf %148, %156 : vector<1x32xf32>
    %158 = arith.addf %155, %157 : vector<1x32xf32>
    %159 = math.tanh %158 : vector<1x32xf32>
    %cst_45 = arith.constant 1.000000e+00 : f32
    %160 = vector.broadcast %cst_45 : f32 to vector<1x32xf32>
    %161 = arith.subf %160, %154 : vector<1x32xf32>
    %162 = arith.mulf %161, %159 : vector<1x32xf32>
    %163 = arith.mulf %154, %121 : vector<1x32xf32>
    %164 = arith.addf %162, %163 : vector<1x32xf32>
    %cst_46 = arith.constant dense<0.000000e+00> : vector<1x128xf32>
    %165 = tpu.matmul %164, %2, %cst_46 {dimension_numbers = #tpu.dot_dimension_numbers<[1], [0], [0], [1], [0, 0, 1, 1], [], []>} : vector<1x32xf32>, vector<32x128xf32>, vector<1x128xf32> -> vector<1x128xf32>
    %166 = arith.addf %165, %3 : vector<1x128xf32>
    %cst_47 = arith.constant dense<0xFF800000> : vector<1xf32>
    %167 = vector.multi_reduction <maximumf>, %166, %cst_47 [1] : vector<1x128xf32> to vector<1xf32>
    %168 = vector.shape_cast %167 : vector<1xf32> to vector<1x1xf32>
    %169 = vector.broadcast %168 : vector<1x1xf32> to vector<1x128xf32>
    %170 = arith.subf %166, %169 : vector<1x128xf32>
    %171 = math.exp %170 : vector<1x128xf32>
    %cst_48 = arith.constant dense<0.000000e+00> : vector<1xf32>
    %172 = vector.multi_reduction <add>, %171, %cst_48 [1] : vector<1x128xf32> to vector<1xf32>
    %173 = vector.shape_cast %172 : vector<1xf32> to vector<1x1xf32>
    %174 = math.log %173 : vector<1x1xf32>
    %175 = vector.broadcast %174 : vector<1x1xf32> to vector<1x128xf32>
    %176 = arith.subf %170, %175 : vector<1x128xf32>
    %c4 = arith.constant 4 : index
    %177 = memref.load %arg1[%c4] : memref<8xi32, #tpu.memory_space<smem>>
    %178 = arith.index_cast %177 : i32 to index
    %c0_49 = arith.constant 0 : index
    %c0_50 = arith.constant 0 : index
    %179 = vector.load %arg2[%178, %c0_49, %c0_50] : memref<16x1x32xf32, #tpu.memory_space<vmem>>, vector<1x1x32xf32>
    %180 = vector.shape_cast %179 : vector<1x1x32xf32> to vector<1x32xf32>
    %cst_51 = arith.constant 0.000000e+00 : f32
    %181 = vector.broadcast %cst_51 : f32 to vector<1x32xf32>
    %182 = arith.maximumf %180, %181 : vector<1x32xf32>
    %183 = tpu.concatenate %182, %164 in 1 : vector<1x32xf32>, vector<1x32xf32> -> vector<1x64xf32>
    %cst_52 = arith.constant dense<0.000000e+00> : vector<1x128xf32>
    %184 = tpu.matmul %183, %0, %cst_52 {dimension_numbers = #tpu.dot_dimension_numbers<[1], [0], [0], [1], [0, 0, 1, 1], [], []>} : vector<1x64xf32>, vector<64x128xf32>, vector<1x128xf32> -> vector<1x128xf32>
    %185 = arith.addf %184, %1 : vector<1x128xf32>
    %186 = vector.extract_strided_slice %185 {offsets = [0, 0], sizes = [1, 32], strides = [1, 1]} : vector<1x128xf32> to vector<1x32xf32>
    %187 = arith.negf %186 : vector<1x32xf32>
    %188 = math.exp %187 : vector<1x32xf32>
    %cst_53 = arith.constant 1.000000e+00 : f32
    %189 = vector.broadcast %cst_53 : f32 to vector<1x32xf32>
    %190 = arith.addf %189, %188 : vector<1x32xf32>
    %191 = arith.divf %189, %190 : vector<1x32xf32>
    %192 = vector.extract_strided_slice %185 {offsets = [0, 32], sizes = [1, 32], strides = [1, 1]} : vector<1x128xf32> to vector<1x32xf32>
    %193 = arith.negf %192 : vector<1x32xf32>
    %194 = math.exp %193 : vector<1x32xf32>
    %cst_54 = arith.constant 1.000000e+00 : f32
    %195 = vector.broadcast %cst_54 : f32 to vector<1x32xf32>
    %196 = arith.addf %195, %194 : vector<1x32xf32>
    %197 = arith.divf %195, %196 : vector<1x32xf32>
    %198 = vector.extract_strided_slice %185 {offsets = [0, 64], sizes = [1, 32], strides = [1, 1]} : vector<1x128xf32> to vector<1x32xf32>
    %199 = vector.extract_strided_slice %185 {offsets = [0, 96], sizes = [1, 32], strides = [1, 1]} : vector<1x128xf32> to vector<1x32xf32>
    %200 = arith.mulf %191, %199 : vector<1x32xf32>
    %201 = arith.addf %198, %200 : vector<1x32xf32>
    %202 = math.tanh %201 : vector<1x32xf32>
    %cst_55 = arith.constant 1.000000e+00 : f32
    %203 = vector.broadcast %cst_55 : f32 to vector<1x32xf32>
    %204 = arith.subf %203, %197 : vector<1x32xf32>
    %205 = arith.mulf %204, %202 : vector<1x32xf32>
    %206 = arith.mulf %197, %164 : vector<1x32xf32>
    %207 = arith.addf %205, %206 : vector<1x32xf32>
    %cst_56 = arith.constant dense<0.000000e+00> : vector<1x128xf32>
    %208 = tpu.matmul %207, %2, %cst_56 {dimension_numbers = #tpu.dot_dimension_numbers<[1], [0], [0], [1], [0, 0, 1, 1], [], []>} : vector<1x32xf32>, vector<32x128xf32>, vector<1x128xf32> -> vector<1x128xf32>
    %209 = arith.addf %208, %3 : vector<1x128xf32>
    %cst_57 = arith.constant dense<0xFF800000> : vector<1xf32>
    %210 = vector.multi_reduction <maximumf>, %209, %cst_57 [1] : vector<1x128xf32> to vector<1xf32>
    %211 = vector.shape_cast %210 : vector<1xf32> to vector<1x1xf32>
    %212 = vector.broadcast %211 : vector<1x1xf32> to vector<1x128xf32>
    %213 = arith.subf %209, %212 : vector<1x128xf32>
    %214 = math.exp %213 : vector<1x128xf32>
    %cst_58 = arith.constant dense<0.000000e+00> : vector<1xf32>
    %215 = vector.multi_reduction <add>, %214, %cst_58 [1] : vector<1x128xf32> to vector<1xf32>
    %216 = vector.shape_cast %215 : vector<1xf32> to vector<1x1xf32>
    %217 = math.log %216 : vector<1x1xf32>
    %218 = vector.broadcast %217 : vector<1x1xf32> to vector<1x128xf32>
    %219 = arith.subf %213, %218 : vector<1x128xf32>
    %c5 = arith.constant 5 : index
    %220 = memref.load %arg1[%c5] : memref<8xi32, #tpu.memory_space<smem>>
    %221 = arith.index_cast %220 : i32 to index
    %c0_59 = arith.constant 0 : index
    %c0_60 = arith.constant 0 : index
    %222 = vector.load %arg2[%221, %c0_59, %c0_60] : memref<16x1x32xf32, #tpu.memory_space<vmem>>, vector<1x1x32xf32>
    %223 = vector.shape_cast %222 : vector<1x1x32xf32> to vector<1x32xf32>
    %cst_61 = arith.constant 0.000000e+00 : f32
    %224 = vector.broadcast %cst_61 : f32 to vector<1x32xf32>
    %225 = arith.maximumf %223, %224 : vector<1x32xf32>
    %226 = tpu.concatenate %225, %207 in 1 : vector<1x32xf32>, vector<1x32xf32> -> vector<1x64xf32>
    %cst_62 = arith.constant dense<0.000000e+00> : vector<1x128xf32>
    %227 = tpu.matmul %226, %0, %cst_62 {dimension_numbers = #tpu.dot_dimension_numbers<[1], [0], [0], [1], [0, 0, 1, 1], [], []>} : vector<1x64xf32>, vector<64x128xf32>, vector<1x128xf32> -> vector<1x128xf32>
    %228 = arith.addf %227, %1 : vector<1x128xf32>
    %229 = vector.extract_strided_slice %228 {offsets = [0, 0], sizes = [1, 32], strides = [1, 1]} : vector<1x128xf32> to vector<1x32xf32>
    %230 = arith.negf %229 : vector<1x32xf32>
    %231 = math.exp %230 : vector<1x32xf32>
    %cst_63 = arith.constant 1.000000e+00 : f32
    %232 = vector.broadcast %cst_63 : f32 to vector<1x32xf32>
    %233 = arith.addf %232, %231 : vector<1x32xf32>
    %234 = arith.divf %232, %233 : vector<1x32xf32>
    %235 = vector.extract_strided_slice %228 {offsets = [0, 32], sizes = [1, 32], strides = [1, 1]} : vector<1x128xf32> to vector<1x32xf32>
    %236 = arith.negf %235 : vector<1x32xf32>
    %237 = math.exp %236 : vector<1x32xf32>
    %cst_64 = arith.constant 1.000000e+00 : f32
    %238 = vector.broadcast %cst_64 : f32 to vector<1x32xf32>
    %239 = arith.addf %238, %237 : vector<1x32xf32>
    %240 = arith.divf %238, %239 : vector<1x32xf32>
    %241 = vector.extract_strided_slice %228 {offsets = [0, 64], sizes = [1, 32], strides = [1, 1]} : vector<1x128xf32> to vector<1x32xf32>
    %242 = vector.extract_strided_slice %228 {offsets = [0, 96], sizes = [1, 32], strides = [1, 1]} : vector<1x128xf32> to vector<1x32xf32>
    %243 = arith.mulf %234, %242 : vector<1x32xf32>
    %244 = arith.addf %241, %243 : vector<1x32xf32>
    %245 = math.tanh %244 : vector<1x32xf32>
    %cst_65 = arith.constant 1.000000e+00 : f32
    %246 = vector.broadcast %cst_65 : f32 to vector<1x32xf32>
    %247 = arith.subf %246, %240 : vector<1x32xf32>
    %248 = arith.mulf %247, %245 : vector<1x32xf32>
    %249 = arith.mulf %240, %207 : vector<1x32xf32>
    %250 = arith.addf %248, %249 : vector<1x32xf32>
    %cst_66 = arith.constant dense<0.000000e+00> : vector<1x128xf32>
    %251 = tpu.matmul %250, %2, %cst_66 {dimension_numbers = #tpu.dot_dimension_numbers<[1], [0], [0], [1], [0, 0, 1, 1], [], []>} : vector<1x32xf32>, vector<32x128xf32>, vector<1x128xf32> -> vector<1x128xf32>
    %252 = arith.addf %251, %3 : vector<1x128xf32>
    %cst_67 = arith.constant dense<0xFF800000> : vector<1xf32>
    %253 = vector.multi_reduction <maximumf>, %252, %cst_67 [1] : vector<1x128xf32> to vector<1xf32>
    %254 = vector.shape_cast %253 : vector<1xf32> to vector<1x1xf32>
    %255 = vector.broadcast %254 : vector<1x1xf32> to vector<1x128xf32>
    %256 = arith.subf %252, %255 : vector<1x128xf32>
    %257 = math.exp %256 : vector<1x128xf32>
    %cst_68 = arith.constant dense<0.000000e+00> : vector<1xf32>
    %258 = vector.multi_reduction <add>, %257, %cst_68 [1] : vector<1x128xf32> to vector<1xf32>
    %259 = vector.shape_cast %258 : vector<1xf32> to vector<1x1xf32>
    %260 = math.log %259 : vector<1x1xf32>
    %261 = vector.broadcast %260 : vector<1x1xf32> to vector<1x128xf32>
    %262 = arith.subf %256, %261 : vector<1x128xf32>
    %c6 = arith.constant 6 : index
    %263 = memref.load %arg1[%c6] : memref<8xi32, #tpu.memory_space<smem>>
    %264 = arith.index_cast %263 : i32 to index
    %c0_69 = arith.constant 0 : index
    %c0_70 = arith.constant 0 : index
    %265 = vector.load %arg2[%264, %c0_69, %c0_70] : memref<16x1x32xf32, #tpu.memory_space<vmem>>, vector<1x1x32xf32>
    %266 = vector.shape_cast %265 : vector<1x1x32xf32> to vector<1x32xf32>
    %cst_71 = arith.constant 0.000000e+00 : f32
    %267 = vector.broadcast %cst_71 : f32 to vector<1x32xf32>
    %268 = arith.maximumf %266, %267 : vector<1x32xf32>
    %269 = tpu.concatenate %268, %250 in 1 : vector<1x32xf32>, vector<1x32xf32> -> vector<1x64xf32>
    %cst_72 = arith.constant dense<0.000000e+00> : vector<1x128xf32>
    %270 = tpu.matmul %269, %0, %cst_72 {dimension_numbers = #tpu.dot_dimension_numbers<[1], [0], [0], [1], [0, 0, 1, 1], [], []>} : vector<1x64xf32>, vector<64x128xf32>, vector<1x128xf32> -> vector<1x128xf32>
    %271 = arith.addf %270, %1 : vector<1x128xf32>
    %272 = vector.extract_strided_slice %271 {offsets = [0, 0], sizes = [1, 32], strides = [1, 1]} : vector<1x128xf32> to vector<1x32xf32>
    %273 = arith.negf %272 : vector<1x32xf32>
    %274 = math.exp %273 : vector<1x32xf32>
    %cst_73 = arith.constant 1.000000e+00 : f32
    %275 = vector.broadcast %cst_73 : f32 to vector<1x32xf32>
    %276 = arith.addf %275, %274 : vector<1x32xf32>
    %277 = arith.divf %275, %276 : vector<1x32xf32>
    %278 = vector.extract_strided_slice %271 {offsets = [0, 32], sizes = [1, 32], strides = [1, 1]} : vector<1x128xf32> to vector<1x32xf32>
    %279 = arith.negf %278 : vector<1x32xf32>
    %280 = math.exp %279 : vector<1x32xf32>
    %cst_74 = arith.constant 1.000000e+00 : f32
    %281 = vector.broadcast %cst_74 : f32 to vector<1x32xf32>
    %282 = arith.addf %281, %280 : vector<1x32xf32>
    %283 = arith.divf %281, %282 : vector<1x32xf32>
    %284 = vector.extract_strided_slice %271 {offsets = [0, 64], sizes = [1, 32], strides = [1, 1]} : vector<1x128xf32> to vector<1x32xf32>
    %285 = vector.extract_strided_slice %271 {offsets = [0, 96], sizes = [1, 32], strides = [1, 1]} : vector<1x128xf32> to vector<1x32xf32>
    %286 = arith.mulf %277, %285 : vector<1x32xf32>
    %287 = arith.addf %284, %286 : vector<1x32xf32>
    %288 = math.tanh %287 : vector<1x32xf32>
    %cst_75 = arith.constant 1.000000e+00 : f32
    %289 = vector.broadcast %cst_75 : f32 to vector<1x32xf32>
    %290 = arith.subf %289, %283 : vector<1x32xf32>
    %291 = arith.mulf %290, %288 : vector<1x32xf32>
    %292 = arith.mulf %283, %250 : vector<1x32xf32>
    %293 = arith.addf %291, %292 : vector<1x32xf32>
    %cst_76 = arith.constant dense<0.000000e+00> : vector<1x128xf32>
    %294 = tpu.matmul %293, %2, %cst_76 {dimension_numbers = #tpu.dot_dimension_numbers<[1], [0], [0], [1], [0, 0, 1, 1], [], []>} : vector<1x32xf32>, vector<32x128xf32>, vector<1x128xf32> -> vector<1x128xf32>
    %295 = arith.addf %294, %3 : vector<1x128xf32>
    %cst_77 = arith.constant dense<0xFF800000> : vector<1xf32>
    %296 = vector.multi_reduction <maximumf>, %295, %cst_77 [1] : vector<1x128xf32> to vector<1xf32>
    %297 = vector.shape_cast %296 : vector<1xf32> to vector<1x1xf32>
    %298 = vector.broadcast %297 : vector<1x1xf32> to vector<1x128xf32>
    %299 = arith.subf %295, %298 : vector<1x128xf32>
    %300 = math.exp %299 : vector<1x128xf32>
    %cst_78 = arith.constant dense<0.000000e+00> : vector<1xf32>
    %301 = vector.multi_reduction <add>, %300, %cst_78 [1] : vector<1x128xf32> to vector<1xf32>
    %302 = vector.shape_cast %301 : vector<1xf32> to vector<1x1xf32>
    %303 = math.log %302 : vector<1x1xf32>
    %304 = vector.broadcast %303 : vector<1x1xf32> to vector<1x128xf32>
    %305 = arith.subf %299, %304 : vector<1x128xf32>
    %c7 = arith.constant 7 : index
    %306 = memref.load %arg1[%c7] : memref<8xi32, #tpu.memory_space<smem>>
    %307 = arith.index_cast %306 : i32 to index
    %c0_79 = arith.constant 0 : index
    %c0_80 = arith.constant 0 : index
    %308 = vector.load %arg2[%307, %c0_79, %c0_80] : memref<16x1x32xf32, #tpu.memory_space<vmem>>, vector<1x1x32xf32>
    %309 = vector.shape_cast %308 : vector<1x1x32xf32> to vector<1x32xf32>
    %cst_81 = arith.constant 0.000000e+00 : f32
    %310 = vector.broadcast %cst_81 : f32 to vector<1x32xf32>
    %311 = arith.maximumf %309, %310 : vector<1x32xf32>
    %312 = tpu.concatenate %311, %293 in 1 : vector<1x32xf32>, vector<1x32xf32> -> vector<1x64xf32>
    %cst_82 = arith.constant dense<0.000000e+00> : vector<1x128xf32>
    %313 = tpu.matmul %312, %0, %cst_82 {dimension_numbers = #tpu.dot_dimension_numbers<[1], [0], [0], [1], [0, 0, 1, 1], [], []>} : vector<1x64xf32>, vector<64x128xf32>, vector<1x128xf32> -> vector<1x128xf32>
    %314 = arith.addf %313, %1 : vector<1x128xf32>
    %315 = vector.extract_strided_slice %314 {offsets = [0, 0], sizes = [1, 32], strides = [1, 1]} : vector<1x128xf32> to vector<1x32xf32>
    %316 = arith.negf %315 : vector<1x32xf32>
    %317 = math.exp %316 : vector<1x32xf32>
    %cst_83 = arith.constant 1.000000e+00 : f32
    %318 = vector.broadcast %cst_83 : f32 to vector<1x32xf32>
    %319 = arith.addf %318, %317 : vector<1x32xf32>
    %320 = arith.divf %318, %319 : vector<1x32xf32>
    %321 = vector.extract_strided_slice %314 {offsets = [0, 32], sizes = [1, 32], strides = [1, 1]} : vector<1x128xf32> to vector<1x32xf32>
    %322 = arith.negf %321 : vector<1x32xf32>
    %323 = math.exp %322 : vector<1x32xf32>
    %cst_84 = arith.constant 1.000000e+00 : f32
    %324 = vector.broadcast %cst_84 : f32 to vector<1x32xf32>
    %325 = arith.addf %324, %323 : vector<1x32xf32>
    %326 = arith.divf %324, %325 : vector<1x32xf32>
    %327 = vector.extract_strided_slice %314 {offsets = [0, 64], sizes = [1, 32], strides = [1, 1]} : vector<1x128xf32> to vector<1x32xf32>
    %328 = vector.extract_strided_slice %314 {offsets = [0, 96], sizes = [1, 32], strides = [1, 1]} : vector<1x128xf32> to vector<1x32xf32>
    %329 = arith.mulf %320, %328 : vector<1x32xf32>
    %330 = arith.addf %327, %329 : vector<1x32xf32>
    %331 = math.tanh %330 : vector<1x32xf32>
    %cst_85 = arith.constant 1.000000e+00 : f32
    %332 = vector.broadcast %cst_85 : f32 to vector<1x32xf32>
    %333 = arith.subf %332, %326 : vector<1x32xf32>
    %334 = arith.mulf %333, %331 : vector<1x32xf32>
    %335 = arith.mulf %326, %293 : vector<1x32xf32>
    %336 = arith.addf %334, %335 : vector<1x32xf32>
    %cst_86 = arith.constant dense<0.000000e+00> : vector<1x128xf32>
    %337 = tpu.matmul %336, %2, %cst_86 {dimension_numbers = #tpu.dot_dimension_numbers<[1], [0], [0], [1], [0, 0, 1, 1], [], []>} : vector<1x32xf32>, vector<32x128xf32>, vector<1x128xf32> -> vector<1x128xf32>
    %338 = arith.addf %337, %3 : vector<1x128xf32>
    %cst_87 = arith.constant dense<0xFF800000> : vector<1xf32>
    %339 = vector.multi_reduction <maximumf>, %338, %cst_87 [1] : vector<1x128xf32> to vector<1xf32>
    %340 = vector.shape_cast %339 : vector<1xf32> to vector<1x1xf32>
    %341 = vector.broadcast %340 : vector<1x1xf32> to vector<1x128xf32>
    %342 = arith.subf %338, %341 : vector<1x128xf32>
    %343 = math.exp %342 : vector<1x128xf32>
    %cst_88 = arith.constant dense<0.000000e+00> : vector<1xf32>
    %344 = vector.multi_reduction <add>, %343, %cst_88 [1] : vector<1x128xf32> to vector<1xf32>
    %345 = vector.shape_cast %344 : vector<1xf32> to vector<1x1xf32>
    %346 = math.log %345 : vector<1x1xf32>
    %347 = vector.broadcast %346 : vector<1x1xf32> to vector<1x128xf32>
    %348 = arith.subf %342, %347 : vector<1x128xf32>
    %349 = tpu.concatenate %47, %90, %133, %176, %219, %262, %305, %348 in 0 : vector<1x128xf32>, vector<1x128xf32>, vector<1x128xf32>, vector<1x128xf32>, vector<1x128xf32>, vector<1x128xf32>, vector<1x128xf32>, vector<1x128xf32> -> vector<8x128xf32>
    %c0_89 = arith.constant 0 : index
    %c0_90 = arith.constant 0 : index
    %350 = vector.load %arg8[%c0_89, %c0_90] : memref<8x128xf32, #tpu.memory_space<vmem>>, vector<8x128xf32>
    tpu.vector_store %arg8[%c0_89, %c0_90], %349 {strides = array<i32>} : memref<8x128xf32, #tpu.memory_space<vmem>>, vector<8x128xf32>,
    %c0_91 = arith.constant 0 : index
    %c0_92 = arith.constant 0 : index
    %351 = vector.load %arg9[%c0_91, %c0_92] : memref<1x32xf32, #tpu.memory_space<vmem>>, vector<1x32xf32>
    tpu.vector_store %arg9[%c0_91, %c0_92], %336 {strides = array<i32>} : memref<1x32xf32, #tpu.memory_space<vmem>>, vector<1x32xf32>,
    return
  }
  func.func @transform_0(%arg0: i32, %arg1: memref<8xi32, #tpu.memory_space<smem>>) -> (i32, i32, i32) {
    %c0_i32 = arith.constant 0 : i32
    %c0_i32_0 = arith.constant 0 : i32
    %c0_i32_1 = arith.constant 0 : i32
    %c0_i32_2 = arith.constant 0 : i32
    return %c0_i32, %c0_i32_0, %c0_i32_1 : i32, i32, i32
  }
  func.func @transform_1(%arg0: i32, %arg1: memref<8xi32, #tpu.memory_space<smem>>) -> (i32, i32) {
    %c0_i32 = arith.constant 0 : i32
    %c0_i32_0 = arith.constant 0 : i32
    %c0_i32_1 = arith.constant 0 : i32
    return %c0_i32, %c0_i32_0 : i32, i32
  }
  func.func @transform_2(%arg0: i32, %arg1: memref<8xi32, #tpu.memory_space<smem>>) -> (i32, i32) {
    %c0_i32 = arith.constant 0 : i32
    %c0_i32_0 = arith.constant 0 : i32
    %c0_i32_1 = arith.constant 0 : i32
    return %c0_i32, %c0_i32_0 : i32, i32
  }
  func.func @transform_3(%arg0: i32, %arg1: memref<8xi32, #tpu.memory_space<smem>>) -> (i32, i32) {
    %c0_i32 = arith.constant 0 : i32
    %c0_i32_0 = arith.constant 0 : i32
    %c0_i32_1 = arith.constant 0 : i32
    return %c0_i32, %c0_i32_0 : i32, i32
  }
  func.func @transform_4(%arg0: i32, %arg1: memref<8xi32, #tpu.memory_space<smem>>) -> (i32, i32) {
    %c0_i32 = arith.constant 0 : i32
    %c0_i32_0 = arith.constant 0 : i32
    %c0_i32_1 = arith.constant 0 : i32
    return %c0_i32, %c0_i32_0 : i32, i32
  }
  func.func @transform_5(%arg0: i32, %arg1: memref<8xi32, #tpu.memory_space<smem>>) -> (i32, i32) {
    %c0_i32 = arith.constant 0 : i32
    %c0_i32_0 = arith.constant 0 : i32
    %c0_i32_1 = arith.constant 0 : i32
    return %c0_i32, %c0_i32_0 : i32, i32
  }
  func.func @transform_6(%arg0: i32, %arg1: memref<8xi32, #tpu.memory_space<smem>>) -> (i32, i32) {
    %c0_i32 = arith.constant 0 : i32
    %c0_i32_0 = arith.constant 0 : i32
    %c0_i32_1 = arith.constant 0 : i32
    return %c0_i32, %c0_i32_0 : i32, i32
  }
  func.func @transform_7(%arg0: i32, %arg1: memref<8xi32, #tpu.memory_space<smem>>) -> (i32, i32) {
    %c0_i32 = arith.constant 0 : i32
    %c0_i32_0 = arith.constant 0 : i32
    %c0_i32_1 = arith.constant 0 : i32
    return %c0_i32, %c0_i32_0 : i32, i32
  }
}

</mosaic_0001>

<llo_original>
// kernel: tpu_custom_call.1
$region0: #{tpu_custom_call.1}
  #allocation0 [shape = 'u32[]', space=smem, size = 0x4, offset = 0x4, fixed_abs, tag = 'smem constant byte address 0x4 - core index']
  #allocation1 [shape = 'u32[144,128]{1,0:T(1,128)}', space=vmem, size = 0x12000, scoped, tag = 'internal scratch']
  #allocation2 [shape = 's32[1]{0}', space=sflag, size = 0x4, scoped, tag = 'scoped memory for tpu_custom_call.1']
  #allocation3 [shape = 'u8[512]{0}', space=smem, size = 0x200, scoped, tag = 'prefetched SMEM operand 0']
  %s0 = inlined_call_operand.hbm [shape: s32[8], index: 0, kind: input, shape index: {}]
  %s1 = inlined_call_operand.hbm [shape: f32[16,1,32], index: 1, kind: input, shape index: {}]
  %s2 = inlined_call_operand.vmem [shape: f32[1,32], index: 2, kind: input, shape index: {}]
  %s3 = inlined_call_operand.hbm [shape: f32[64,128], index: 3, kind: input, shape index: {}]
  %s4 = inlined_call_operand.vmem [shape: f32[1,128], index: 4, kind: input, shape index: {}]
  %s5 = inlined_call_operand.hbm [shape: f32[32,128], index: 5, kind: input, shape index: {}]
  %s6 = inlined_call_operand.vmem [shape: f32[1,128], index: 6, kind: input, shape index: {}]
  %s7 = inlined_call_operand.hbm [shape: f32[8,128], index: 7, kind: output, shape index: {0}]
  %s8 = inlined_call_operand.hbm [shape: f32[1,32], index: 8, kind: output, shape index: {1}]
  %9 = xla_tuple %s7, %s8
  %s10 = sld [smem:[#allocation0]]
  $region54: #{tpu_custom_call.1} parent=0
    _
  %s12 = ssub.s32 1, %s10
  %s13 = scalar_select 0, %s12, %s10
  %15 = dma.hbm_to_smem %s0, 16, [#allocation3], [#allocation2]
  %16 = dma.done [#allocation2], 16
  %17 = sfence
  $region1: #{tpu_custom_call.1} parent=0
    #allocation4 [shape = 'u8[8192]{0}', space=vmem, size = 0x2000, scoped, tag = 'input window, operand 1, single buffered']
    #allocation5 [shape = 's32[1]{0}', space=sflag, size = 0x4, scoped, tag = 'scoped memory for tpu_custom_call.1']
    #allocation6 [shape = 's32[1]{0}', space=sflag, size = 0x4, scoped, tag = 'scoped memory for tpu_custom_call.1']
    #allocation7 [shape = 'u8[32768]{0}', space=vmem, size = 0x8000, scoped, tag = 'input window, operand 3, single buffered']
    #allocation8 [shape = 's32[1]{0}', space=sflag, size = 0x4, scoped, tag = 'scoped memory for tpu_custom_call.1']
    #allocation9 [shape = 'u8[16384]{0}', space=vmem, size = 0x4000, scoped, tag = 'input window, operand 5, single buffered']
    #allocation10 [shape = 'u8[4096]{0}', space=vmem, size = 0x1000, scoped, tag = 'output window, operand 0, single buffered']
    #allocation11 [shape = 'u8[512]{0}', space=vmem, size = 0x400, scoped, tag = 'output window, operand 1, single buffered']
    #allocation12 [shape = 's32[1]{0}', space=sflag, size = 0x4, scoped, tag = 'scoped memory for tpu_custom_call.1']
    %18 = vsyncpa [#allocation5], 0
    %19 = vsyncpa [#allocation8], 0
    %20 = vsyncpa [#allocation6], 0
    %21 = vsyncpa [#allocation12], 0
    // Predicated region
    $region2: #{tpu_custom_call.1} parent=1 // pred_check
      _
    $region3: #{tpu_custom_call.1} parent=1 // pred_check_branch
      %23 = sbr.rel (0) target = $region5
    $region4: #{tpu_custom_call.1} parent=1 // pred_region
      %s25 = ssub.s32 256, 256
      %26 = vsyncadd [#allocation5], %s25
      %s27 = sshll.u32 [#allocation4], 4
      %s28 = int_to_ptr.vmem [resolvable:$true] %s27
      %33 = dma.hbm_to_vmem [thread:$0]  %s1, 256, %s28, [#allocation5], 16, 16, 1
    $region5: #{tpu_custom_call.1} parent=1 // pred_fallthru
      _
    // Predicated region
    $region6: #{tpu_custom_call.1} parent=1 // pred_check
      _
    $region7: #{tpu_custom_call.1} parent=1 // pred_check_branch
      %35 = sbr.rel (0) target = $region9
    $region8: #{tpu_custom_call.1} parent=1 // pred_region
      _
    $region9: #{tpu_custom_call.1} parent=1 // pred_fallthru
      _
    // Predicated region
    $region10: #{tpu_custom_call.1} parent=1 // pred_check
      _
    $region11: #{tpu_custom_call.1} parent=1 // pred_check_branch
      %37 = sbr.rel (0) target = $region13
    $region12: #{tpu_custom_call.1} parent=1 // pred_region
      %s39 = ssub.s32 1024, 1024
      %40 = vsyncadd [#allocation8], %s39
      %s41 = sshll.u32 [#allocation7], 4
      %s42 = int_to_ptr.vmem [resolvable:$true] %s41
      %47 = dma.hbm_to_vmem [thread:$0]  %s3, 1024, %s42, [#allocation8], 128, 128, 8
    $region13: #{tpu_custom_call.1} parent=1 // pred_fallthru
      _
    // Predicated region
    $region14: #{tpu_custom_call.1} parent=1 // pred_check
      _
    $region15: #{tpu_custom_call.1} parent=1 // pred_check_branch
      %49 = sbr.rel (0) target = $region17
    $region16: #{tpu_custom_call.1} parent=1 // pred_region
      _
    $region17: #{tpu_custom_call.1} parent=1 // pred_fallthru
      _
    // Predicated region
    $region18: #{tpu_custom_call.1} parent=1 // pred_check
      _
    $region19: #{tpu_custom_call.1} parent=1 // pred_check_branch
      %51 = sbr.rel (0) target = $region21
    $region20: #{tpu_custom_call.1} parent=1 // pred_region
      %s53 = ssub.s32 512, 512
      %54 = vsyncadd [#allocation8], %s53
      %s55 = sshll.u32 [#allocation9], 4
      %s56 = int_to_ptr.vmem [resolvable:$true] %s55
      %61 = dma.hbm_to_vmem [thread:$0]  %s5, 512, %s56, [#allocation8], 128, 128, 8
    $region21: #{tpu_custom_call.1} parent=1 // pred_fallthru
      _
    // Predicated region
    $region22: #{tpu_custom_call.1} parent=1 // pred_check
      _
    $region23: #{tpu_custom_call.1} parent=1 // pred_check_branch
      %63 = sbr.rel (0) target = $region25
    $region24: #{tpu_custom_call.1} parent=1 // pred_region
      _
    $region25: #{tpu_custom_call.1} parent=1 // pred_fallthru
      _
    // Predicated region
    $region26: #{tpu_custom_call.1} parent=1 // pred_check
      _
    $region27: #{tpu_custom_call.1} parent=1 // pred_check_branch
      %65 = sbr.rel (0) target = $region29
    $region28: #{tpu_custom_call.1} parent=1 // pred_region
      %66 = dma.done [#allocation5], 256
    $region29: #{tpu_custom_call.1} parent=1 // pred_fallthru
      _
    // Predicated region
    $region30: #{tpu_custom_call.1} parent=1 // pred_check
      _
    $region31: #{tpu_custom_call.1} parent=1 // pred_check_branch
      %68 = sbr.rel (0) target = $region33
    $region32: #{tpu_custom_call.1} parent=1 // pred_region
      %69 = dma.done [#allocation8], 1024
    $region33: #{tpu_custom_call.1} parent=1 // pred_fallthru
      _
    // Predicated region
    $region34: #{tpu_custom_call.1} parent=1 // pred_check
      _
    $region35: #{tpu_custom_call.1} parent=1 // pred_check_branch
      %71 = sbr.rel (0) target = $region37
    $region36: #{tpu_custom_call.1} parent=1 // pred_region
      %72 = dma.done [#allocation8], 512
    $region37: #{tpu_custom_call.1} parent=1 // pred_fallthru
      _
    %v73 = vld [vmem:[#allocation7] sm:$0xff]
    %v74 = vld [vmem:[#allocation7 + $0x8] sm:$0xff]
    %v75 = vld [vmem:[#allocation7 + $0x10] sm:$0xff]
    %v76 = vld [vmem:[#allocation7 + $0x18] sm:$0xff]
    %v77 = vld [vmem:[#allocation7 + $0x20] sm:$0xff]
    %v78 = vld [vmem:[#allocation7 + $0x28] sm:$0xff]
    %v79 = vld [vmem:[#allocation7 + $0x30] sm:$0xff]
    %v80 = vld [vmem:[#allocation7 + $0x38] sm:$0xff]
    %v81 = vld [vmem:[%s4] sm:$0x1]
    %v82 = vld [vmem:[#allocation9] sm:$0xff]
    %v83 = vld [vmem:[#allocation9 + $0x8] sm:$0xff]
    %v84 = vld [vmem:[#allocation9 + $0x10] sm:$0xff]
    %v85 = vld [vmem:[#allocation9 + $0x18] sm:$0xff]
    %v86 = vld [vmem:[%s6] sm:$0x1]
    %v87 = vld [vmem:[%s2] sm:$0x1]
    %s88 = sld [smem:[#allocation3]]
    %s89 = scalar_lea.vmem [#allocation4], %s88
    %v90 = vld [vmem:[%s89] sm:$0x1]
    %v91 = vmax.f32 %v90, 0.0
    %v93 = vlaneseq
    %v94 = vshrl.u32 %v93, 7
    %v95 = vsub.s32 0, %v94
    %v96 = vrot.slane %v87, %v95
    %97 = vrot.lane.b32.xlu0 %v96, 32
    %v98 = vpop.permute.xlu0 %97
    %vm100 = vcmask 261120
    %v101 = vsel %vm100, %v91, %v98
    %vm102 = vcmask 523264
    %v104 = vsel %vm102, %v101, 0
    %106 = vmatprep.subr.mxu0 0.0
    %107 = vmatpush1.msra.mxu0 0.0
    %108 = vmatprep.subr.mxu0 0.0
    %109 = vmatpush1.msra.mxu0 0.0
    %110 = vmatprep.subr.mxu0 0.0
    %111 = vmatpush1.msra.mxu0 0.0
    %112 = vmatprep.subr.mxu0 0.0
    %113 = vmatpush1.msra.mxu0 0.0
    %114 = vmatprep.subr.mxu0 0.0
    %115 = vmatpush1.msra.mxu0 0.0
    %116 = vmatprep.subr.mxu0 0.0
    %117 = vmatpush1.msra.mxu0 0.0
    %118 = vmatprep.subr.mxu0 0.0
    %119 = vmatpush1.msra.mxu0 0.0
    %120 = vmatprep.subr.mxu0 0.0
    %121 = vmatpush1.msra.mxu0 0.0
    %122 = vmatprep.subr.mxu0 0.0
    %123 = vmatpush1.msra.mxu0 %v80
    %124 = vmatprep.subr.mxu0 0.0
    %125 = vmatpush1.msra.mxu0 %v79
    %126 = vmatprep.subr.mxu0 0.0
    %127 = vmatpush1.msra.mxu0 %v78
    %128 = vmatprep.subr.mxu0 0.0
    %129 = vmatpush1.msra.mxu0 %v77
    %130 = vmatprep.subr.mxu0 0.0
    %131 = vmatpush1.msra.mxu0 %v76
    %132 = vmatprep.subr.mxu0 0.0
    %133 = vmatpush1.msra.mxu0 %v75
    %134 = vmatprep.subr.mxu0 0.0
    %135 = vmatpush1.msra.mxu0 %v74
    %136 = vmatprep.subr.mxu0 0.0
    %137 = vmatpush1.msra.mxu0 %v73
    %138 = vmatprep.subr.mxu0 0.0
    %139 = vmatpush2.msra.mxu0 0.0
    %140 = vmatprep.subr.mxu0 0.0
    %141 = vmatpush2.msra.mxu0 0.0
    %142 = vmatprep.subr.mxu0 0.0
    %143 = vmatpush2.msra.mxu0 0.0
    %144 = vmatprep.subr.mxu0 0.0
    %145 = vmatpush2.msra.mxu0 0.0
    %146 = vmatprep.subr.mxu0 0.0
    %147 = vmatpush2.msra.mxu0 0.0
    %148 = vmatprep.subr.mxu0 0.0
    %149 = vmatpush2.msra.mxu0 0.0
    %150 = vmatprep.subr.mxu0 0.0
    %151 = vmatpush2.msra.mxu0 0.0
    %152 = vmatprep.subr.mxu0 0.0
    %153 = vmatpush2.msra.mxu0 0.0
    %154 = vmatprep.subr.mxu0 0.0
    %155 = vmatpush2.msra.mxu0 0.0
    %156 = vmatprep.subr.mxu0 0.0
    %157 = vmatpush2.msra.mxu0 0.0
    %158 = vmatprep.subr.mxu0 0.0
    %159 = vmatpush2.msra.mxu0 0.0
    %160 = vmatprep.subr.mxu0 0.0
    %161 = vmatpush2.msra.mxu0 0.0
    %162 = vmatprep.subr.mxu0 0.0
    %163 = vmatpush2.msra.mxu0 0.0
    %164 = vmatprep.subr.mxu0 0.0
    %165 = vmatpush2.msra.mxu0 0.0
    %166 = vmatprep.subr.mxu0 0.0
    %167 = vmatpush2.msra.mxu0 0.0
    %168 = vmatprep.subr.mxu0 0.0
    %169 = vmatpush2.msra.mxu0 0.0
    %170 = vmatprep.mubr.f32.mxu0 0.0
    %171 = vmatmul.mubr.f32.gmra.mxu0 %v104
    %v172 = vpop.f32.mrf.mxu0
    %v173 = vadd.f32 %v81, %v172
    %v174 = vpop.f32.mrf.mxu0
    %175 = vdwg.mxu0
    %v176 = vxor.u32 %v173, 2147483648
    %v177 = vmul.f32 %v176, 1.442695
    %v178 = vpow.pop %v177
    %v179 = vadd.f32 %v178, 1.0
    %v180 = vrcp.pop %v179
    %v181 = vmul.f32 1.0, %v180
    %183 = vrot.lane.b32.xlu0 %v173, 32
    %v184 = vpop.permute.xlu0 %183
    %v186 = vmul.f32 %v181, %v184
    %188 = vrot.lane.b32.xlu0 %v186, 64
    %v189 = vpop.permute.xlu0 %188
    %v191 = vadd.f32 %v173, %v189
    %v192 = vtanh.pop %v191
    %v193 = vsub.f32 1.0, %v181
    %195 = vrot.lane.b32.xlu0 %v192, 96
    %v196 = vpop.permute.xlu0 %195
    %v198 = vmul.f32 %v193, %v196
    %v199 = vmul.f32 %v181, %v98
    %v200 = vadd.f32 %v198, %v199
    %202 = vrot.lane.b32.xlu0 %v200, 96
    %v203 = vpop.permute.xlu0 %202
    %v204 = vsel %vm100, %v203, 0
    %206 = vmatprep.subr.mxu0 0.0
    %207 = vmatpush1.msra.mxu0 0.0
    %208 = vmatprep.subr.mxu0 0.0
    %209 = vmatpush1.msra.mxu0 0.0
    %210 = vmatprep.subr.mxu0 0.0
    %211 = vmatpush1.msra.mxu0 0.0
    %212 = vmatprep.subr.mxu0 0.0
    %213 = vmatpush1.msra.mxu0 0.0
    %214 = vmatprep.subr.mxu0 0.0
    %215 = vmatpush1.msra.mxu0 0.0
    %216 = vmatprep.subr.mxu0 0.0
    %217 = vmatpush1.msra.mxu0 0.0
    %218 = vmatprep.subr.mxu0 0.0
    %219 = vmatpush1.msra.mxu0 0.0
    %220 = vmatprep.subr.mxu0 0.0
    %221 = vmatpush1.msra.mxu0 0.0
    %222 = vmatprep.subr.mxu0 0.0
    %223 = vmatpush1.msra.mxu0 0.0
    %224 = vmatprep.subr.mxu0 0.0
    %225 = vmatpush1.msra.mxu0 0.0
    %226 = vmatprep.subr.mxu0 0.0
    %227 = vmatpush1.msra.mxu0 0.0
    %228 = vmatprep.subr.mxu0 0.0
    %229 = vmatpush1.msra.mxu0 0.0
    %230 = vmatprep.subr.mxu0 0.0
    %231 = vmatpush1.msra.mxu0 %v85
    %232 = vmatprep.subr.mxu0 0.0
    %233 = vmatpush1.msra.mxu0 %v84
    %234 = vmatprep.subr.mxu0 0.0
    %235 = vmatpush1.msra.mxu0 %v83
    %236 = vmatprep.subr.mxu0 0.0
    %237 = vmatpush1.msra.mxu0 %v82
    %238 = vmatprep.subr.mxu0 0.0
    %239 = vmatpush2.msra.mxu0 0.0
    %240 = vmatprep.subr.mxu0 0.0
    %241 = vmatpush2.msra.mxu0 0.0
    %242 = vmatprep.subr.mxu0 0.0
    %243 = vmatpush2.msra.mxu0 0.0
    %244 = vmatprep.subr.mxu0 0.0
    %245 = vmatpush2.msra.mxu0 0.0
    %246 = vmatprep.subr.mxu0 0.0
    %247 = vmatpush2.msra.mxu0 0.0
    %248 = vmatprep.subr.mxu0 0.0
    %249 = vmatpush2.msra.mxu0 0.0
    %250 = vmatprep.subr.mxu0 0.0
    %251 = vmatpush2.msra.mxu0 0.0
    %252 = vmatprep.subr.mxu0 0.0
    %253 = vmatpush2.msra.mxu0 0.0
    %254 = vmatprep.subr.mxu0 0.0
    %255 = vmatpush2.msra.mxu0 0.0
    %256 = vmatprep.subr.mxu0 0.0
    %257 = vmatpush2.msra.mxu0 0.0
    %258 = vmatprep.subr.mxu0 0.0
    %259 = vmatpush2.msra.mxu0 0.0
    %260 = vmatprep.subr.mxu0 0.0
    %261 = vmatpush2.msra.mxu0 0.0
    %262 = vmatprep.subr.mxu0 0.0
    %263 = vmatpush2.msra.mxu0 0.0
    %264 = vmatprep.subr.mxu0 0.0
    %265 = vmatpush2.msra.mxu0 0.0
    %266 = vmatprep.subr.mxu0 0.0
    %267 = vmatpush2.msra.mxu0 0.0
    %268 = vmatprep.subr.mxu0 0.0
    %269 = vmatpush2.msra.mxu0 0.0
    %270 = vmatprep.mubr.f32.mxu0 0.0
    %271 = vmatmul.mubr.f32.gmra.mxu0 %v204
    %v272 = vpop.f32.mrf.mxu0
    %v273 = vadd.f32 %v86, %v272
    %v274 = vpop.f32.mrf.mxu0
    %275 = vdwg.mxu0
    %vm276 = vcmask 1040384
    %v277 = vsel %vm276, %v273, -inf
    %278 = vmax.xlane.f32.xlu0 %v277
    %v279 = vpop.xlane.xlu0 %278
    %v280 = vsub.f32 %v273, %v279
    %v281 = vmul.f32 %v280, 1.442695
    %v282 = vpow.pop %v281
    %v283 = vsel %vm276, %v282, 0.0
    %284 = vadd.xlane.f32.xlu0 %v283
    %v285 = vpop.xlane.xlu0 %284
    %v286 = vlog2.pop %v285
    %v287 = vmul.f32 %v286, 0.6931472
    %v288 = vsub.f32 %v280, %v287
    %s289 = sld [smem:[#allocation3 + $0x1]]
    %s290 = scalar_lea.vmem [#allocation4], %s289
    %v291 = vld [vmem:[%s290] sm:$0x1]
    %v292 = vmax.f32 %v291, 0.0
    %v293 = vsel %vm100, %v292, %v200
    %v295 = vsel %vm102, %v293, 0
    %297 = vmatprep.subr.mxu0 0.0
    %298 = vmatpush1.msra.mxu0 0.0
    %299 = vmatprep.subr.mxu0 0.0
    %300 = vmatpush1.msra.mxu0 0.0
    %301 = vmatprep.subr.mxu0 0.0
    %302 = vmatpush1.msra.mxu0 0.0
    %303 = vmatprep.subr.mxu0 0.0
    %304 = vmatpush1.msra.mxu0 0.0
    %305 = vmatprep.subr.mxu0 0.0
    %306 = vmatpush1.msra.mxu0 0.0
    %307 = vmatprep.subr.mxu0 0.0
    %308 = vmatpush1.msra.mxu0 0.0
    %309 = vmatprep.subr.mxu0 0.0
    %310 = vmatpush1.msra.mxu0 0.0
    %311 = vmatprep.subr.mxu0 0.0
    %312 = vmatpush1.msra.mxu0 0.0
    %313 = vmatprep.subr.mxu0 0.0
    %314 = vmatpush1.msra.mxu0 %v80
    %315 = vmatprep.subr.mxu0 0.0
    %316 = vmatpush1.msra.mxu0 %v79
    %317 = vmatprep.subr.mxu0 0.0
    %318 = vmatpush1.msra.mxu0 %v78
    %319 = vmatprep.subr.mxu0 0.0
    %320 = vmatpush1.msra.mxu0 %v77
    %321 = vmatprep.subr.mxu0 0.0
    %322 = vmatpush1.msra.mxu0 %v76
    %323 = vmatprep.subr.mxu0 0.0
    %324 = vmatpush1.msra.mxu0 %v75
    %325 = vmatprep.subr.mxu0 0.0
    %326 = vmatpush1.msra.mxu0 %v74
    %327 = vmatprep.subr.mxu0 0.0
    %328 = vmatpush1.msra.mxu0 %v73
    %329 = vmatprep.subr.mxu0 0.0
    %330 = vmatpush2.msra.mxu0 0.0
    %331 = vmatprep.subr.mxu0 0.0
    %332 = vmatpush2.msra.mxu0 0.0
    %333 = vmatprep.subr.mxu0 0.0
    %334 = vmatpush2.msra.mxu0 0.0
    %335 = vmatprep.subr.mxu0 0.0
    %336 = vmatpush2.msra.mxu0 0.0
    %337 = vmatprep.subr.mxu0 0.0
    %338 = vmatpush2.msra.mxu0 0.0
    %339 = vmatprep.subr.mxu0 0.0
    %340 = vmatpush2.msra.mxu0 0.0
    %341 = vmatprep.subr.mxu0 0.0
    %342 = vmatpush2.msra.mxu0 0.0
    %343 = vmatprep.subr.mxu0 0.0
    %344 = vmatpush2.msra.mxu0 0.0
    %345 = vmatprep.subr.mxu0 0.0
    %346 = vmatpush2.msra.mxu0 0.0
    %347 = vmatprep.subr.mxu0 0.0
    %348 = vmatpush2.msra.mxu0 0.0
    %349 = vmatprep.subr.mxu0 0.0
    %350 = vmatpush2.msra.mxu0 0.0
    %351 = vmatprep.subr.mxu0 0.0
    %352 = vmatpush2.msra.mxu0 0.0
    %353 = vmatprep.subr.mxu0 0.0
    %354 = vmatpush2.msra.mxu0 0.0
    %355 = vmatprep.subr.mxu0 0.0
    %356 = vmatpush2.msra.mxu0 0.0
    %357 = vmatprep.subr.mxu0 0.0
    %358 = vmatpush2.msra.mxu0 0.0
    %359 = vmatprep.subr.mxu0 0.0
    %360 = vmatpush2.msra.mxu0 0.0
    %361 = vmatprep.mubr.f32.mxu0 0.0
    %362 = vmatmul.mubr.f32.gmra.mxu0 %v295
    %v363 = vpop.f32.mrf.mxu0
    %v364 = vadd.f32 %v81, %v363
    %v365 = vpop.f32.mrf.mxu0
    %366 = vdwg.mxu0
    %v367 = vxor.u32 %v364, 2147483648
    %v368 = vmul.f32 %v367, 1.442695
    %v369 = vpow.pop %v368
    %v370 = vadd.f32 %v369, 1.0
    %v371 = vrcp.pop %v370
    %v372 = vmul.f32 1.0, %v371
    %374 = vrot.lane.b32.xlu0 %v364, 32
    %v375 = vpop.permute.xlu0 %374
    %v377 = vmul.f32 %v372, %v375
    %379 = vrot.lane.b32.xlu0 %v377, 64
    %v380 = vpop.permute.xlu0 %379
    %v382 = vadd.f32 %v364, %v380
    %v383 = vtanh.pop %v382
    %v384 = vsub.f32 1.0, %v372
    %386 = vrot.lane.b32.xlu0 %v383, 96
    %v387 = vpop.permute.xlu0 %386
    %v389 = vmul.f32 %v384, %v387
    %v390 = vmul.f32 %v372, %v200
    %v391 = vadd.f32 %v389, %v390
    %393 = vrot.lane.b32.xlu0 %v391, 96
    %v394 = vpop.permute.xlu0 %393
    %v395 = vsel %vm100, %v394, 0
    %397 = vmatprep.subr.mxu0 0.0
    %398 = vmatpush1.msra.mxu0 0.0
    %399 = vmatprep.subr.mxu0 0.0
    %400 = vmatpush1.msra.mxu0 0.0
    %401 = vmatprep.subr.mxu0 0.0
    %402 = vmatpush1.msra.mxu0 0.0
    %403 = vmatprep.subr.mxu0 0.0
    %404 = vmatpush1.msra.mxu0 0.0
    %405 = vmatprep.subr.mxu0 0.0
    %406 = vmatpush1.msra.mxu0 0.0
    %407 = vmatprep.subr.mxu0 0.0
    %408 = vmatpush1.msra.mxu0 0.0
    %409 = vmatprep.subr.mxu0 0.0
    %410 = vmatpush1.msra.mxu0 0.0
    %411 = vmatprep.subr.mxu0 0.0
    %412 = vmatpush1.msra.mxu0 0.0
    %413 = vmatprep.subr.mxu0 0.0
    %414 = vmatpush1.msra.mxu0 0.0
    %415 = vmatprep.subr.mxu0 0.0
    %416 = vmatpush1.msra.mxu0 0.0
    %417 = vmatprep.subr.mxu0 0.0
    %418 = vmatpush1.msra.mxu0 0.0
    %419 = vmatprep.subr.mxu0 0.0
    %420 = vmatpush1.msra.mxu0 0.0
    %421 = vmatprep.subr.mxu0 0.0
    %422 = vmatpush1.msra.mxu0 %v85
    %423 = vmatprep.subr.mxu0 0.0
    %424 = vmatpush1.msra.mxu0 %v84
    %425 = vmatprep.subr.mxu0 0.0
    %426 = vmatpush1.msra.mxu0 %v83
    %427 = vmatprep.subr.mxu0 0.0
    %428 = vmatpush1.msra.mxu0 %v82
    %429 = vmatprep.subr.mxu0 0.0
    %430 = vmatpush2.msra.mxu0 0.0
    %431 = vmatprep.subr.mxu0 0.0
    %432 = vmatpush2.msra.mxu0 0.0
    %433 = vmatprep.subr.mxu0 0.0
    %434 = vmatpush2.msra.mxu0 0.0
    %435 = vmatprep.subr.mxu0 0.0
    %436 = vmatpush2.msra.mxu0 0.0
    %437 = vmatprep.subr.mxu0 0.0
    %438 = vmatpush2.msra.mxu0 0.0
    %439 = vmatprep.subr.mxu0 0.0
    %440 = vmatpush2.msra.mxu0 0.0
    %441 = vmatprep.subr.mxu0 0.0
    %442 = vmatpush2.msra.mxu0 0.0
    %443 = vmatprep.subr.mxu0 0.0
    %444 = vmatpush2.msra.mxu0 0.0
    %445 = vmatprep.subr.mxu0 0.0
    %446 = vmatpush2.msra.mxu0 0.0
    %447 = vmatprep.subr.mxu0 0.0
    %448 = vmatpush2.msra.mxu0 0.0
    %449 = vmatprep.subr.mxu0 0.0
    %450 = vmatpush2.msra.mxu0 0.0
    %451 = vmatprep.subr.mxu0 0.0
    %452 = vmatpush2.msra.mxu0 0.0
    %453 = vmatprep.subr.mxu0 0.0
    %454 = vmatpush2.msra.mxu0 0.0
    %455 = vmatprep.subr.mxu0 0.0
    %456 = vmatpush2.msra.mxu0 0.0
    %457 = vmatprep.subr.mxu0 0.0
    %458 = vmatpush2.msra.mxu0 0.0
    %459 = vmatprep.subr.mxu0 0.0
    %460 = vmatpush2.msra.mxu0 0.0
    %461 = vmatprep.mubr.f32.mxu0 0.0
    %462 = vmatmul.mubr.f32.gmra.mxu0 %v395
    %v463 = vpop.f32.mrf.mxu0
    %v464 = vadd.f32 %v86, %v463
    %v465 = vpop.f32.mrf.mxu0
    %466 = vdwg.mxu0
    %v467 = vsel %vm276, %v464, -inf
    %468 = vmax.xlane.f32.xlu0 %v467
    %v469 = vpop.xlane.xlu0 %468
    %v470 = vsub.f32 %v464, %v469
    %v471 = vmul.f32 %v470, 1.442695
    %v472 = vpow.pop %v471
    %v473 = vsel %vm276, %v472, 0.0
    %474 = vadd.xlane.f32.xlu0 %v473
    %v475 = vpop.xlane.xlu0 %474
    %v476 = vlog2.pop %v475
    %v477 = vmul.f32 %v476, 0.6931472
    %v478 = vsub.f32 %v470, %v477
    %s479 = sld [smem:[#allocation3 + $0x2]]
    %s480 = scalar_lea.vmem [#allocation4], %s479
    %v481 = vld [vmem:[%s480] sm:$0x1]
    %v482 = vmax.f32 %v481, 0.0
    %v483 = vsel %vm100, %v482, %v391
    %v485 = vsel %vm102, %v483, 0
    %487 = vmatprep.subr.mxu0 0.0
    %488 = vmatpush1.msra.mxu0 0.0
    %489 = vmatprep.subr.mxu0 0.0
    %490 = vmatpush1.msra.mxu0 0.0
    %491 = vmatprep.subr.mxu0 0.0
    %492 = vmatpush1.msra.mxu0 0.0
    %493 = vmatprep.subr.mxu0 0.0
    %494 = vmatpush1.msra.mxu0 0.0
    %495 = vmatprep.subr.mxu0 0.0
    %496 = vmatpush1.msra.mxu0 0.0
    %497 = vmatprep.subr.mxu0 0.0
    %498 = vmatpush1.msra.mxu0 0.0
    %499 = vmatprep.subr.mxu0 0.0
    %500 = vmatpush1.msra.mxu0 0.0
    %501 = vmatprep.subr.mxu0 0.0
    %502 = vmatpush1.msra.mxu0 0.0
    %503 = vmatprep.subr.mxu0 0.0
    %504 = vmatpush1.msra.mxu0 %v80
    %505 = vmatprep.subr.mxu0 0.0
    %506 = vmatpush1.msra.mxu0 %v79
    %507 = vmatprep.subr.mxu0 0.0
    %508 = vmatpush1.msra.mxu0 %v78
    %509 = vmatprep.subr.mxu0 0.0
    %510 = vmatpush1.msra.mxu0 %v77
    %511 = vmatprep.subr.mxu0 0.0
    %512 = vmatpush1.msra.mxu0 %v76
    %513 = vmatprep.subr.mxu0 0.0
    %514 = vmatpush1.msra.mxu0 %v75
    %515 = vmatprep.subr.mxu0 0.0
    %516 = vmatpush1.msra.mxu0 %v74
    %517 = vmatprep.subr.mxu0 0.0
    %518 = vmatpush1.msra.mxu0 %v73
    %519 = vmatprep.subr.mxu0 0.0
    %520 = vmatpush2.msra.mxu0 0.0
    %521 = vmatprep.subr.mxu0 0.0
    %522 = vmatpush2.msra.mxu0 0.0
    %523 = vmatprep.subr.mxu0 0.0
    %524 = vmatpush2.msra.mxu0 0.0
    %525 = vmatprep.subr.mxu0 0.0
    %526 = vmatpush2.msra.mxu0 0.0
    %527 = vmatprep.subr.mxu0 0.0
    %528 = vmatpush2.msra.mxu0 0.0
    %529 = vmatprep.subr.mxu0 0.0
    %530 = vmatpush2.msra.mxu0 0.0
    %531 = vmatprep.subr.mxu0 0.0
    %532 = vmatpush2.msra.mxu0 0.0
    %533 = vmatprep.subr.mxu0 0.0
    %534 = vmatpush2.msra.mxu0 0.0
    %535 = vmatprep.subr.mxu0 0.0
    %536 = vmatpush2.msra.mxu0 0.0
    %537 = vmatprep.subr.mxu0 0.0
    %538 = vmatpush2.msra.mxu0 0.0
    %539 = vmatprep.subr.mxu0 0.0
    %540 = vmatpush2.msra.mxu0 0.0
    %541 = vmatprep.subr.mxu0 0.0
    %542 = vmatpush2.msra.mxu0 0.0
    %543 = vmatprep.subr.mxu0 0.0
    %544 = vmatpush2.msra.mxu0 0.0
    %545 = vmatprep.subr.mxu0 0.0
    %546 = vmatpush2.msra.mxu0 0.0
    %547 = vmatprep.subr.mxu0 0.0
    %548 = vmatpush2.msra.mxu0 0.0
    %549 = vmatprep.subr.mxu0 0.0
    %550 = vmatpush2.msra.mxu0 0.0
    %551 = vmatprep.mubr.f32.mxu0 0.0
    %552 = vmatmul.mubr.f32.gmra.mxu0 %v485
    %v553 = vpop.f32.mrf.mxu0
    %v554 = vadd.f32 %v81, %v553
    %v555 = vpop.f32.mrf.mxu0
    %556 = vdwg.mxu0
    %v557 = vxor.u32 %v554, 2147483648
    %v558 = vmul.f32 %v557, 1.442695
    %v559 = vpow.pop %v558
    %v560 = vadd.f32 %v559, 1.0
    %v561 = vrcp.pop %v560
    %v562 = vmul.f32 1.0, %v561
    %564 = vrot.lane.b32.xlu0 %v554, 32
    %v565 = vpop.permute.xlu0 %564
    %v567 = vmul.f32 %v562, %v565
    %569 = vrot.lane.b32.xlu0 %v567, 64
    %v570 = vpop.permute.xlu0 %569
    %v572 = vadd.f32 %v554, %v570
    %v573 = vtanh.pop %v572
    %v574 = vsub.f32 1.0, %v562
    %576 = vrot.lane.b32.xlu0 %v573, 96
    %v577 = vpop.permute.xlu0 %576
    %v579 = vmul.f32 %v574, %v577
    %v580 = vmul.f32 %v562, %v391
    %v581 = vadd.f32 %v579, %v580
    %583 = vrot.lane.b32.xlu0 %v581, 96
    %v584 = vpop.permute.xlu0 %583
    %v585 = vsel %vm100, %v584, 0
    %587 = vmatprep.subr.mxu0 0.0
    %588 = vmatpush1.msra.mxu0 0.0
    %589 = vmatprep.subr.mxu0 0.0
    %590 = vmatpush1.msra.mxu0 0.0
    %591 = vmatprep.subr.mxu0 0.0
    %592 = vmatpush1.msra.mxu0 0.0
    %593 = vmatprep.subr.mxu0 0.0
    %594 = vmatpush1.msra.mxu0 0.0
    %595 = vmatprep.subr.mxu0 0.0
    %596 = vmatpush1.msra.mxu0 0.0
    %597 = vmatprep.subr.mxu0 0.0
    %598 = vmatpush1.msra.mxu0 0.0
    %599 = vmatprep.subr.mxu0 0.0
    %600 = vmatpush1.msra.mxu0 0.0
    %601 = vmatprep.subr.mxu0 0.0
    %602 = vmatpush1.msra.mxu0 0.0
    %603 = vmatprep.subr.mxu0 0.0
    %604 = vmatpush1.msra.mxu0 0.0
    %605 = vmatprep.subr.mxu0 0.0
    %606 = vmatpush1.msra.mxu0 0.0
    %607 = vmatprep.subr.mxu0 0.0
    %608 = vmatpush1.msra.mxu0 0.0
    %609 = vmatprep.subr.mxu0 0.0
    %610 = vmatpush1.msra.mxu0 0.0
    %611 = vmatprep.subr.mxu0 0.0
    %612 = vmatpush1.msra.mxu0 %v85
    %613 = vmatprep.subr.mxu0 0.0
    %614 = vmatpush1.msra.mxu0 %v84
    %615 = vmatprep.subr.mxu0 0.0
    %616 = vmatpush1.msra.mxu0 %v83
    %617 = vmatprep.subr.mxu0 0.0
    %618 = vmatpush1.msra.mxu0 %v82
    %619 = vmatprep.subr.mxu0 0.0
    %620 = vmatpush2.msra.mxu0 0.0
    %621 = vmatprep.subr.mxu0 0.0
    %622 = vmatpush2.msra.mxu0 0.0
    %623 = vmatprep.subr.mxu0 0.0
    %624 = vmatpush2.msra.mxu0 0.0
    %625 = vmatprep.subr.mxu0 0.0
    %626 = vmatpush2.msra.mxu0 0.0
    %627 = vmatprep.subr.mxu0 0.0
    %628 = vmatpush2.msra.mxu0 0.0
    %629 = vmatprep.subr.mxu0 0.0
    %630 = vmatpush2.msra.mxu0 0.0
    %631 = vmatprep.subr.mxu0 0.0
    %632 = vmatpush2.msra.mxu0 0.0
    %633 = vmatprep.subr.mxu0 0.0
    %634 = vmatpush2.msra.mxu0 0.0
    %635 = vmatprep.subr.mxu0 0.0
    %636 = vmatpush2.msra.mxu0 0.0
    %637 = vmatprep.subr.mxu0 0.0
    %638 = vmatpush2.msra.mxu0 0.0
    %639 = vmatprep.subr.mxu0 0.0
    %640 = vmatpush2.msra.mxu0 0.0
    %641 = vmatprep.subr.mxu0 0.0
    %642 = vmatpush2.msra.mxu0 0.0
    %643 = vmatprep.subr.mxu0 0.0
    %644 = vmatpush2.msra.mxu0 0.0
    %645 = vmatprep.subr.mxu0 0.0
    %646 = vmatpush2.msra.mxu0 0.0
    %647 = vmatprep.subr.mxu0 0.0
    %648 = vmatpush2.msra.mxu0 0.0
    %649 = vmatprep.subr.mxu0 0.0
    %650 = vmatpush2.msra.mxu0 0.0
    %651 = vmatprep.mubr.f32.mxu0 0.0
    %652 = vmatmul.mubr.f32.gmra.mxu0 %v585
    %v653 = vpop.f32.mrf.mxu0
    %v654 = vadd.f32 %v86, %v653
    %v655 = vpop.f32.mrf.mxu0
    %656 = vdwg.mxu0
    %v657 = vsel %vm276, %v654, -inf
    %658 = vmax.xlane.f32.xlu0 %v657
    %v659 = vpop.xlane.xlu0 %658
    %v660 = vsub.f32 %v654, %v659
    %v661 = vmul.f32 %v660, 1.442695
    %v662 = vpow.pop %v661
    %v663 = vsel %vm276, %v662, 0.0
    %664 = vadd.xlane.f32.xlu0 %v663
    %v665 = vpop.xlane.xlu0 %664
    %v666 = vlog2.pop %v665
    %v667 = vmul.f32 %v666, 0.6931472
    %v668 = vsub.f32 %v660, %v667
    %s669 = sld [smem:[#allocation3 + $0x3]]
    %s670 = scalar_lea.vmem [#allocation4], %s669
    %v671 = vld [vmem:[%s670] sm:$0x1]
    %v672 = vmax.f32 %v671, 0.0
    %v673 = vsel %vm100, %v672, %v581
    %v675 = vsel %vm102, %v673, 0
    %677 = vmatprep.subr.mxu0 0.0
    %678 = vmatpush1.msra.mxu0 0.0
    %679 = vmatprep.subr.mxu0 0.0
    %680 = vmatpush1.msra.mxu0 0.0
    %681 = vmatprep.subr.mxu0 0.0
    %682 = vmatpush1.msra.mxu0 0.0
    %683 = vmatprep.subr.mxu0 0.0
    %684 = vmatpush1.msra.mxu0 0.0
    %685 = vmatprep.subr.mxu0 0.0
    %686 = vmatpush1.msra.mxu0 0.0
    %687 = vmatprep.subr.mxu0 0.0
    %688 = vmatpush1.msra.mxu0 0.0
    %689 = vmatprep.subr.mxu0 0.0
    %690 = vmatpush1.msra.mxu0 0.0
    %691 = vmatprep.subr.mxu0 0.0
    %692 = vmatpush1.msra.mxu0 0.0
    %693 = vmatprep.subr.mxu0 0.0
    %694 = vmatpush1.msra.mxu0 %v80
    %695 = vmatprep.subr.mxu0 0.0
    %696 = vmatpush1.msra.mxu0 %v79
    %697 = vmatprep.subr.mxu0 0.0
    %698 = vmatpush1.msra.mxu0 %v78
    %699 = vmatprep.subr.mxu0 0.0
    %700 = vmatpush1.msra.mxu0 %v77
    %701 = vmatprep.subr.mxu0 0.0
    %702 = vmatpush1.msra.mxu0 %v76
    %703 = vmatprep.subr.mxu0 0.0
    %704 = vmatpush1.msra.mxu0 %v75
    %705 = vmatprep.subr.mxu0 0.0
    %706 = vmatpush1.msra.mxu0 %v74
    %707 = vmatprep.subr.mxu0 0.0
    %708 = vmatpush1.msra.mxu0 %v73
    %709 = vmatprep.subr.mxu0 0.0
    %710 = vmatpush2.msra.mxu0 0.0
    %711 = vmatprep.subr.mxu0 0.0
    %712 = vmatpush2.msra.mxu0 0.0
    %713 = vmatprep.subr.mxu0 0.0
    %714 = vmatpush2.msra.mxu0 0.0
    %715 = vmatprep.subr.mxu0 0.0
    %716 = vmatpush2.msra.mxu0 0.0
    %717 = vmatprep.subr.mxu0 0.0
    %718 = vmatpush2.msra.mxu0 0.0
    %719 = vmatprep.subr.mxu0 0.0
    %720 = vmatpush2.msra.mxu0 0.0
    %721 = vmatprep.subr.mxu0 0.0
    %722 = vmatpush2.msra.mxu0 0.0
    %723 = vmatprep.subr.mxu0 0.0
    %724 = vmatpush2.msra.mxu0 0.0
    %725 = vmatprep.subr.mxu0 0.0
    %726 = vmatpush2.msra.mxu0 0.0
    %727 = vmatprep.subr.mxu0 0.0
    %728 = vmatpush2.msra.mxu0 0.0
    %729 = vmatprep.subr.mxu0 0.0
    %730 = vmatpush2.msra.mxu0 0.0
    %731 = vmatprep.subr.mxu0 0.0
    %732 = vmatpush2.msra.mxu0 0.0
    %733 = vmatprep.subr.mxu0 0.0
    %734 = vmatpush2.msra.mxu0 0.0
    %735 = vmatprep.subr.mxu0 0.0
    %736 = vmatpush2.msra.mxu0 0.0
    %737 = vmatprep.subr.mxu0 0.0
    %738 = vmatpush2.msra.mxu0 0.0
    %739 = vmatprep.subr.mxu0 0.0
    %740 = vmatpush2.msra.mxu0 0.0
    %741 = vmatprep.mubr.f32.mxu0 0.0
    %742 = vmatmul.mubr.f32.gmra.mxu0 %v675
    %v743 = vpop.f32.mrf.mxu0
    %v744 = vadd.f32 %v81, %v743
    %v745 = vpop.f32.mrf.mxu0
    %746 = vdwg.mxu0
    %v747 = vxor.u32 %v744, 2147483648
    %v748 = vmul.f32 %v747, 1.442695
    %v749 = vpow.pop %v748
    %v750 = vadd.f32 %v749, 1.0
    %v751 = vrcp.pop %v750
    %v752 = vmul.f32 1.0, %v751
    %754 = vrot.lane.b32.xlu0 %v744, 32
    %v755 = vpop.permute.xlu0 %754
    %v757 = vmul.f32 %v752, %v755
    %759 = vrot.lane.b32.xlu0 %v757, 64
    %v760 = vpop.permute.xlu0 %759
    %v762 = vadd.f32 %v744, %v760
    %v763 = vtanh.pop %v762
    %v764 = vsub.f32 1.0, %v752
    %766 = vrot.lane.b32.xlu0 %v763, 96
    %v767 = vpop.permute.xlu0 %766
    %v769 = vmul.f32 %v764, %v767
    %v770 = vmul.f32 %v752, %v581
    %v771 = vadd.f32 %v769, %v770
    %773 = vrot.lane.b32.xlu0 %v771, 96
    %v774 = vpop.permute.xlu0 %773
    %v775 = vsel %vm100, %v774, 0
    %777 = vmatprep.subr.mxu0 0.0
    %778 = vmatpush1.msra.mxu0 0.0
    %779 = vmatprep.subr.mxu0 0.0
    %780 = vmatpush1.msra.mxu0 0.0
    %781 = vmatprep.subr.mxu0 0.0
    %782 = vmatpush1.msra.mxu0 0.0
    %783 = vmatprep.subr.mxu0 0.0
    %784 = vmatpush1.msra.mxu0 0.0
    %785 = vmatprep.subr.mxu0 0.0
    %786 = vmatpush1.msra.mxu0 0.0
    %787 = vmatprep.subr.mxu0 0.0
    %788 = vmatpush1.msra.mxu0 0.0
    %789 = vmatprep.subr.mxu0 0.0
    %790 = vmatpush1.msra.mxu0 0.0
    %791 = vmatprep.subr.mxu0 0.0
    %792 = vmatpush1.msra.mxu0 0.0
    %793 = vmatprep.subr.mxu0 0.0
    %794 = vmatpush1.msra.mxu0 0.0
    %795 = vmatprep.subr.mxu0 0.0
    %796 = vmatpush1.msra.mxu0 0.0
    %797 = vmatprep.subr.mxu0 0.0
    %798 = vmatpush1.msra.mxu0 0.0
    %799 = vmatprep.subr.mxu0 0.0
    %800 = vmatpush1.msra.mxu0 0.0
    %801 = vmatprep.subr.mxu0 0.0
    %802 = vmatpush1.msra.mxu0 %v85
    %803 = vmatprep.subr.mxu0 0.0
    %804 = vmatpush1.msra.mxu0 %v84
    %805 = vmatprep.subr.mxu0 0.0
    %806 = vmatpush1.msra.mxu0 %v83
    %807 = vmatprep.subr.mxu0 0.0
    %808 = vmatpush1.msra.mxu0 %v82
    %809 = vmatprep.subr.mxu0 0.0
    %810 = vmatpush2.msra.mxu0 0.0
    %811 = vmatprep.subr.mxu0 0.0
    %812 = vmatpush2.msra.mxu0 0.0
    %813 = vmatprep.subr.mxu0 0.0
    %814 = vmatpush2.msra.mxu0 0.0
    %815 = vmatprep.subr.mxu0 0.0
    %816 = vmatpush2.msra.mxu0 0.0
    %817 = vmatprep.subr.mxu0 0.0
    %818 = vmatpush2.msra.mxu0 0.0
    %819 = vmatprep.subr.mxu0 0.0
    %820 = vmatpush2.msra.mxu0 0.0
    %821 = vmatprep.subr.mxu0 0.0
    %822 = vmatpush2.msra.mxu0 0.0
    %823 = vmatprep.subr.mxu0 0.0
    %824 = vmatpush2.msra.mxu0 0.0
    %825 = vmatprep.subr.mxu0 0.0
    %826 = vmatpush2.msra.mxu0 0.0
    %827 = vmatprep.subr.mxu0 0.0
    %828 = vmatpush2.msra.mxu0 0.0
    %829 = vmatprep.subr.mxu0 0.0
    %830 = vmatpush2.msra.mxu0 0.0
    %831 = vmatprep.subr.mxu0 0.0
    %832 = vmatpush2.msra.mxu0 0.0
    %833 = vmatprep.subr.mxu0 0.0
    %834 = vmatpush2.msra.mxu0 0.0
    %835 = vmatprep.subr.mxu0 0.0
    %836 = vmatpush2.msra.mxu0 0.0
    %837 = vmatprep.subr.mxu0 0.0
    %838 = vmatpush2.msra.mxu0 0.0
    %839 = vmatprep.subr.mxu0 0.0
    %840 = vmatpush2.msra.mxu0 0.0
    %841 = vmatprep.mubr.f32.mxu0 0.0
    %842 = vmatmul.mubr.f32.gmra.mxu0 %v775
    %v843 = vpop.f32.mrf.mxu0
    %v844 = vadd.f32 %v86, %v843
    %v845 = vpop.f32.mrf.mxu0
    %846 = vdwg.mxu0
    %v847 = vsel %vm276, %v844, -inf
    %848 = vmax.xlane.f32.xlu0 %v847
    %v849 = vpop.xlane.xlu0 %848
    %v850 = vsub.f32 %v844, %v849
    %v851 = vmul.f32 %v850, 1.442695
    %v852 = vpow.pop %v851
    %v853 = vsel %vm276, %v852, 0.0
    %854 = vadd.xlane.f32.xlu0 %v853
    %v855 = vpop.xlane.xlu0 %854
    %v856 = vlog2.pop %v855
    %v857 = vmul.f32 %v856, 0.6931472
    %v858 = vsub.f32 %v850, %v857
    %s859 = sld [smem:[#allocation3 + $0x4]]
    %s860 = scalar_lea.vmem [#allocation4], %s859
    %v861 = vld [vmem:[%s860] sm:$0x1]
    %v862 = vmax.f32 %v861, 0.0
    %v863 = vsel %vm100, %v862, %v771
    %v865 = vsel %vm102, %v863, 0
    %867 = vmatprep.subr.mxu0 0.0
    %868 = vmatpush1.msra.mxu0 0.0
    %869 = vmatprep.subr.mxu0 0.0
    %870 = vmatpush1.msra.mxu0 0.0
    %871 = vmatprep.subr.mxu0 0.0
    %872 = vmatpush1.msra.mxu0 0.0
    %873 = vmatprep.subr.mxu0 0.0
    %874 = vmatpush1.msra.mxu0 0.0
    %875 = vmatprep.subr.mxu0 0.0
    %876 = vmatpush1.msra.mxu0 0.0
    %877 = vmatprep.subr.mxu0 0.0
    %878 = vmatpush1.msra.mxu0 0.0
    %879 = vmatprep.subr.mxu0 0.0
    %880 = vmatpush1.msra.mxu0 0.0
    %881 = vmatprep.subr.mxu0 0.0
    %882 = vmatpush1.msra.mxu0 0.0
    %883 = vmatprep.subr.mxu0 0.0
    %884 = vmatpush1.msra.mxu0 %v80
    %885 = vmatprep.subr.mxu0 0.0
    %886 = vmatpush1.msra.mxu0 %v79
    %887 = vmatprep.subr.mxu0 0.0
    %888 = vmatpush1.msra.mxu0 %v78
    %889 = vmatprep.subr.mxu0 0.0
    %890 = vmatpush1.msra.mxu0 %v77
    %891 = vmatprep.subr.mxu0 0.0
    %892 = vmatpush1.msra.mxu0 %v76
    %893 = vmatprep.subr.mxu0 0.0
    %894 = vmatpush1.msra.mxu0 %v75
    %895 = vmatprep.subr.mxu0 0.0
    %896 = vmatpush1.msra.mxu0 %v74
    %897 = vmatprep.subr.mxu0 0.0
    %898 = vmatpush1.msra.mxu0 %v73
    %899 = vmatprep.subr.mxu0 0.0
    %900 = vmatpush2.msra.mxu0 0.0
    %901 = vmatprep.subr.mxu0 0.0
    %902 = vmatpush2.msra.mxu0 0.0
    %903 = vmatprep.subr.mxu0 0.0
    %904 = vmatpush2.msra.mxu0 0.0
    %905 = vmatprep.subr.mxu0 0.0
    %906 = vmatpush2.msra.mxu0 0.0
    %907 = vmatprep.subr.mxu0 0.0
    %908 = vmatpush2.msra.mxu0 0.0
    %909 = vmatprep.subr.mxu0 0.0
    %910 = vmatpush2.msra.mxu0 0.0
    %911 = vmatprep.subr.mxu0 0.0
    %912 = vmatpush2.msra.mxu0 0.0
    %913 = vmatprep.subr.mxu0 0.0
    %914 = vmatpush2.msra.mxu0 0.0
    %915 = vmatprep.subr.mxu0 0.0
    %916 = vmatpush2.msra.mxu0 0.0
    %917 = vmatprep.subr.mxu0 0.0
    %918 = vmatpush2.msra.mxu0 0.0
    %919 = vmatprep.subr.mxu0 0.0
    %920 = vmatpush2.msra.mxu0 0.0
    %921 = vmatprep.subr.mxu0 0.0
    %922 = vmatpush2.msra.mxu0 0.0
    %923 = vmatprep.subr.mxu0 0.0
    %924 = vmatpush2.msra.mxu0 0.0
    %925 = vmatprep.subr.mxu0 0.0
    %926 = vmatpush2.msra.mxu0 0.0
    %927 = vmatprep.subr.mxu0 0.0
    %928 = vmatpush2.msra.mxu0 0.0
    %929 = vmatprep.subr.mxu0 0.0
    %930 = vmatpush2.msra.mxu0 0.0
    %931 = vmatprep.mubr.f32.mxu0 0.0
    %932 = vmatmul.mubr.f32.gmra.mxu0 %v865
    %v933 = vpop.f32.mrf.mxu0
    %v934 = vadd.f32 %v81, %v933
    %v935 = vpop.f32.mrf.mxu0
    %936 = vdwg.mxu0
    %v937 = vxor.u32 %v934, 2147483648
    %v938 = vmul.f32 %v937, 1.442695
    %v939 = vpow.pop %v938
    %v940 = vadd.f32 %v939, 1.0
    %v941 = vrcp.pop %v940
    %v942 = vmul.f32 1.0, %v941
    %944 = vrot.lane.b32.xlu0 %v934, 32
    %v945 = vpop.permute.xlu0 %944
    %v947 = vmul.f32 %v942, %v945
    %949 = vrot.lane.b32.xlu0 %v947, 64
    %v950 = vpop.permute.xlu0 %949
    %v952 = vadd.f32 %v934, %v950
    %v953 = vtanh.pop %v952
    %v954 = vsub.f32 1.0, %v942
    %956 = vrot.lane.b32.xlu0 %v953, 96
    %v957 = vpop.permute.xlu0 %956
    %v959 = vmul.f32 %v954, %v957
    %v960 = vmul.f32 %v942, %v771
    %v961 = vadd.f32 %v959, %v960
    %963 = vrot.lane.b32.xlu0 %v961, 96
    %v964 = vpop.permute.xlu0 %963
    %v965 = vsel %vm100, %v964, 0
    %967 = vmatprep.subr.mxu0 0.0
    %968 = vmatpush1.msra.mxu0 0.0
    %969 = vmatprep.subr.mxu0 0.0
    %970 = vmatpush1.msra.mxu0 0.0
    %971 = vmatprep.subr.mxu0 0.0
    %972 = vmatpush1.msra.mxu0 0.0
    %973 = vmatprep.subr.mxu0 0.0
    %974 = vmatpush1.msra.mxu0 0.0
    %975 = vmatprep.subr.mxu0 0.0
    %976 = vmatpush1.msra.mxu0 0.0
    %977 = vmatprep.subr.mxu0 0.0
    %978 = vmatpush1.msra.mxu0 0.0
    %979 = vmatprep.subr.mxu0 0.0
    %980 = vmatpush1.msra.mxu0 0.0
    %981 = vmatprep.subr.mxu0 0.0
    %982 = vmatpush1.msra.mxu0 0.0
    %983 = vmatprep.subr.mxu0 0.0
    %984 = vmatpush1.msra.mxu0 0.0
    %985 = vmatprep.subr.mxu0 0.0
    %986 = vmatpush1.msra.mxu0 0.0
    %987 = vmatprep.subr.mxu0 0.0
    %988 = vmatpush1.msra.mxu0 0.0
    %989 = vmatprep.subr.mxu0 0.0
    %990 = vmatpush1.msra.mxu0 0.0
    %991 = vmatprep.subr.mxu0 0.0
    %992 = vmatpush1.msra.mxu0 %v85
    %993 = vmatprep.subr.mxu0 0.0
    %994 = vmatpush1.msra.mxu0 %v84
    %995 = vmatprep.subr.mxu0 0.0
    %996 = vmatpush1.msra.mxu0 %v83
    %997 = vmatprep.subr.mxu0 0.0
    %998 = vmatpush1.msra.mxu0 %v82
    %999 = vmatprep.subr.mxu0 0.0
    %1000 = vmatpush2.msra.mxu0 0.0
    %1001 = vmatprep.subr.mxu0 0.0
    %1002 = vmatpush2.msra.mxu0 0.0
    %1003 = vmatprep.subr.mxu0 0.0
    %1004 = vmatpush2.msra.mxu0 0.0
    %1005 = vmatprep.subr.mxu0 0.0
    %1006 = vmatpush2.msra.mxu0 0.0
    %1007 = vmatprep.subr.mxu0 0.0
    %1008 = vmatpush2.msra.mxu0 0.0
    %1009 = vmatprep.subr.mxu0 0.0
    %1010 = vmatpush2.msra.mxu0 0.0
    %1011 = vmatprep.subr.mxu0 0.0
    %1012 = vmatpush2.msra.mxu0 0.0
    %1013 = vmatprep.subr.mxu0 0.0
    %1014 = vmatpush2.msra.mxu0 0.0
    %1015 = vmatprep.subr.mxu0 0.0
    %1016 = vmatpush2.msra.mxu0 0.0
    %1017 = vmatprep.subr.mxu0 0.0
    %1018 = vmatpush2.msra.mxu0 0.0
    %1019 = vmatprep.subr.mxu0 0.0
    %1020 = vmatpush2.msra.mxu0 0.0
    %1021 = vmatprep.subr.mxu0 0.0
    %1022 = vmatpush2.msra.mxu0 0.0
    %1023 = vmatprep.subr.mxu0 0.0
    %1024 = vmatpush2.msra.mxu0 0.0
    %1025 = vmatprep.subr.mxu0 0.0
    %1026 = vmatpush2.msra.mxu0 0.0
    %1027 = vmatprep.subr.mxu0 0.0
    %1028 = vmatpush2.msra.mxu0 0.0
    %1029 = vmatprep.subr.mxu0 0.0
    %1030 = vmatpush2.msra.mxu0 0.0
    %1031 = vmatprep.mubr.f32.mxu0 0.0
    %1032 = vmatmul.mubr.f32.gmra.mxu0 %v965
    %v1033 = vpop.f32.mrf.mxu0
    %v1034 = vadd.f32 %v86, %v1033
    %v1035 = vpop.f32.mrf.mxu0
    %1036 = vdwg.mxu0
    %v1037 = vsel %vm276, %v1034, -inf
    %1038 = vmax.xlane.f32.xlu0 %v1037
    %v1039 = vpop.xlane.xlu0 %1038
    %v1040 = vsub.f32 %v1034, %v1039
    %v1041 = vmul.f32 %v1040, 1.442695
    %v1042 = vpow.pop %v1041
    %v1043 = vsel %vm276, %v1042, 0.0
    %1044 = vadd.xlane.f32.xlu0 %v1043
    %v1045 = vpop.xlane.xlu0 %1044
    %v1046 = vlog2.pop %v1045
    %v1047 = vmul.f32 %v1046, 0.6931472
    %v1048 = vsub.f32 %v1040, %v1047
    %s1049 = sld [smem:[#allocation3 + $0x5]]
    %s1050 = scalar_lea.vmem [#allocation4], %s1049
    %v1051 = vld [vmem:[%s1050] sm:$0x1]
    %v1052 = vmax.f32 %v1051, 0.0
    %v1053 = vsel %vm100, %v1052, %v961
    %v1055 = vsel %vm102, %v1053, 0
    %1057 = vmatprep.subr.mxu0 0.0
    %1058 = vmatpush1.msra.mxu0 0.0
    %1059 = vmatprep.subr.mxu0 0.0
    %1060 = vmatpush1.msra.mxu0 0.0
    %1061 = vmatprep.subr.mxu0 0.0
    %1062 = vmatpush1.msra.mxu0 0.0
    %1063 = vmatprep.subr.mxu0 0.0
    %1064 = vmatpush1.msra.mxu0 0.0
    %1065 = vmatprep.subr.mxu0 0.0
    %1066 = vmatpush1.msra.mxu0 0.0
    %1067 = vmatprep.subr.mxu0 0.0
    %1068 = vmatpush1.msra.mxu0 0.0
    %1069 = vmatprep.subr.mxu0 0.0
    %1070 = vmatpush1.msra.mxu0 0.0
    %1071 = vmatprep.subr.mxu0 0.0
    %1072 = vmatpush1.msra.mxu0 0.0
    %1073 = vmatprep.subr.mxu0 0.0
    %1074 = vmatpush1.msra.mxu0 %v80
    %1075 = vmatprep.subr.mxu0 0.0
    %1076 = vmatpush1.msra.mxu0 %v79
    %1077 = vmatprep.subr.mxu0 0.0
    %1078 = vmatpush1.msra.mxu0 %v78
    %1079 = vmatprep.subr.mxu0 0.0
    %1080 = vmatpush1.msra.mxu0 %v77
    %1081 = vmatprep.subr.mxu0 0.0
    %1082 = vmatpush1.msra.mxu0 %v76
    %1083 = vmatprep.subr.mxu0 0.0
    %1084 = vmatpush1.msra.mxu0 %v75
    %1085 = vmatprep.subr.mxu0 0.0
    %1086 = vmatpush1.msra.mxu0 %v74
    %1087 = vmatprep.subr.mxu0 0.0
    %1088 = vmatpush1.msra.mxu0 %v73
    %1089 = vmatprep.subr.mxu0 0.0
    %1090 = vmatpush2.msra.mxu0 0.0
    %1091 = vmatprep.subr.mxu0 0.0
    %1092 = vmatpush2.msra.mxu0 0.0
    %1093 = vmatprep.subr.mxu0 0.0
    %1094 = vmatpush2.msra.mxu0 0.0
    %1095 = vmatprep.subr.mxu0 0.0
    %1096 = vmatpush2.msra.mxu0 0.0
    %1097 = vmatprep.subr.mxu0 0.0
    %1098 = vmatpush2.msra.mxu0 0.0
    %1099 = vmatprep.subr.mxu0 0.0
    %1100 = vmatpush2.msra.mxu0 0.0
    %1101 = vmatprep.subr.mxu0 0.0
    %1102 = vmatpush2.msra.mxu0 0.0
    %1103 = vmatprep.subr.mxu0 0.0
    %1104 = vmatpush2.msra.mxu0 0.0
    %1105 = vmatprep.subr.mxu0 0.0
    %1106 = vmatpush2.msra.mxu0 0.0
    %1107 = vmatprep.subr.mxu0 0.0
    %1108 = vmatpush2.msra.mxu0 0.0
    %1109 = vmatprep.subr.mxu0 0.0
    %1110 = vmatpush2.msra.mxu0 0.0
    %1111 = vmatprep.subr.mxu0 0.0
    %1112 = vmatpush2.msra.mxu0 0.0
    %1113 = vmatprep.subr.mxu0 0.0
    %1114 = vmatpush2.msra.mxu0 0.0
    %1115 = vmatprep.subr.mxu0 0.0
    %1116 = vmatpush2.msra.mxu0 0.0
    %1117 = vmatprep.subr.mxu0 0.0
    %1118 = vmatpush2.msra.mxu0 0.0
    %1119 = vmatprep.subr.mxu0 0.0
    %1120 = vmatpush2.msra.mxu0 0.0
    %1121 = vmatprep.mubr.f32.mxu0 0.0
    %1122 = vmatmul.mubr.f32.gmra.mxu0 %v1055
    %v1123 = vpop.f32.mrf.mxu0
    %v1124 = vadd.f32 %v81, %v1123
    %v1125 = vpop.f32.mrf.mxu0
    %1126 = vdwg.mxu0
    %v1127 = vxor.u32 %v1124, 2147483648
    %v1128 = vmul.f32 %v1127, 1.442695
    %v1129 = vpow.pop %v1128
    %v1130 = vadd.f32 %v1129, 1.0
    %v1131 = vrcp.pop %v1130
    %v1132 = vmul.f32 1.0, %v1131
    %1134 = vrot.lane.b32.xlu0 %v1124, 32
    %v1135 = vpop.permute.xlu0 %1134
    %v1137 = vmul.f32 %v1132, %v1135
    %1139 = vrot.lane.b32.xlu0 %v1137, 64
    %v1140 = vpop.permute.xlu0 %1139
    %v1142 = vadd.f32 %v1124, %v1140
    %v1143 = vtanh.pop %v1142
    %v1144 = vsub.f32 1.0, %v1132
    %1146 = vrot.lane.b32.xlu0 %v1143, 96
    %v1147 = vpop.permute.xlu0 %1146
    %v1149 = vmul.f32 %v1144, %v1147
    %v1150 = vmul.f32 %v1132, %v961
    %v1151 = vadd.f32 %v1149, %v1150
    %1153 = vrot.lane.b32.xlu0 %v1151, 96
    %v1154 = vpop.permute.xlu0 %1153
    %v1155 = vsel %vm100, %v1154, 0
    %1157 = vmatprep.subr.mxu0 0.0
    %1158 = vmatpush1.msra.mxu0 0.0
    %1159 = vmatprep.subr.mxu0 0.0
    %1160 = vmatpush1.msra.mxu0 0.0
    %1161 = vmatprep.subr.mxu0 0.0
    %1162 = vmatpush1.msra.mxu0 0.0
    %1163 = vmatprep.subr.mxu0 0.0
    %1164 = vmatpush1.msra.mxu0 0.0
    %1165 = vmatprep.subr.mxu0 0.0
    %1166 = vmatpush1.msra.mxu0 0.0
    %1167 = vmatprep.subr.mxu0 0.0
    %1168 = vmatpush1.msra.mxu0 0.0
    %1169 = vmatprep.subr.mxu0 0.0
    %1170 = vmatpush1.msra.mxu0 0.0
    %1171 = vmatprep.subr.mxu0 0.0
    %1172 = vmatpush1.msra.mxu0 0.0
    %1173 = vmatprep.subr.mxu0 0.0
    %1174 = vmatpush1.msra.mxu0 0.0
    %1175 = vmatprep.subr.mxu0 0.0
    %1176 = vmatpush1.msra.mxu0 0.0
    %1177 = vmatprep.subr.mxu0 0.0
    %1178 = vmatpush1.msra.mxu0 0.0
    %1179 = vmatprep.subr.mxu0 0.0
    %1180 = vmatpush1.msra.mxu0 0.0
    %1181 = vmatprep.subr.mxu0 0.0
    %1182 = vmatpush1.msra.mxu0 %v85
    %1183 = vmatprep.subr.mxu0 0.0
    %1184 = vmatpush1.msra.mxu0 %v84
    %1185 = vmatprep.subr.mxu0 0.0
    %1186 = vmatpush1.msra.mxu0 %v83
    %1187 = vmatprep.subr.mxu0 0.0
    %1188 = vmatpush1.msra.mxu0 %v82
    %1189 = vmatprep.subr.mxu0 0.0
    %1190 = vmatpush2.msra.mxu0 0.0
    %1191 = vmatprep.subr.mxu0 0.0
    %1192 = vmatpush2.msra.mxu0 0.0
    %1193 = vmatprep.subr.mxu0 0.0
    %1194 = vmatpush2.msra.mxu0 0.0
    %1195 = vmatprep.subr.mxu0 0.0
    %1196 = vmatpush2.msra.mxu0 0.0
    %1197 = vmatprep.subr.mxu0 0.0
    %1198 = vmatpush2.msra.mxu0 0.0
    %1199 = vmatprep.subr.mxu0 0.0
    %1200 = vmatpush2.msra.mxu0 0.0
    %1201 = vmatprep.subr.mxu0 0.0
    %1202 = vmatpush2.msra.mxu0 0.0
    %1203 = vmatprep.subr.mxu0 0.0
    %1204 = vmatpush2.msra.mxu0 0.0
    %1205 = vmatprep.subr.mxu0 0.0
    %1206 = vmatpush2.msra.mxu0 0.0
    %1207 = vmatprep.subr.mxu0 0.0
    %1208 = vmatpush2.msra.mxu0 0.0
    %1209 = vmatprep.subr.mxu0 0.0
    %1210 = vmatpush2.msra.mxu0 0.0
    %1211 = vmatprep.subr.mxu0 0.0
    %1212 = vmatpush2.msra.mxu0 0.0
    %1213 = vmatprep.subr.mxu0 0.0
    %1214 = vmatpush2.msra.mxu0 0.0
    %1215 = vmatprep.subr.mxu0 0.0
    %1216 = vmatpush2.msra.mxu0 0.0
    %1217 = vmatprep.subr.mxu0 0.0
    %1218 = vmatpush2.msra.mxu0 0.0
    %1219 = vmatprep.subr.mxu0 0.0
    %1220 = vmatpush2.msra.mxu0 0.0
    %1221 = vmatprep.mubr.f32.mxu0 0.0
    %1222 = vmatmul.mubr.f32.gmra.mxu0 %v1155
    %v1223 = vpop.f32.mrf.mxu0
    %v1224 = vadd.f32 %v86, %v1223
    %v1225 = vpop.f32.mrf.mxu0
    %1226 = vdwg.mxu0
    %v1227 = vsel %vm276, %v1224, -inf
    %1228 = vmax.xlane.f32.xlu0 %v1227
    %v1229 = vpop.xlane.xlu0 %1228
    %v1230 = vsub.f32 %v1224, %v1229
    %v1231 = vmul.f32 %v1230, 1.442695
    %v1232 = vpow.pop %v1231
    %v1233 = vsel %vm276, %v1232, 0.0
    %1234 = vadd.xlane.f32.xlu0 %v1233
    %v1235 = vpop.xlane.xlu0 %1234
    %v1236 = vlog2.pop %v1235
    %v1237 = vmul.f32 %v1236, 0.6931472
    %v1238 = vsub.f32 %v1230, %v1237
    %s1239 = sld [smem:[#allocation3 + $0x6]]
    %s1240 = scalar_lea.vmem [#allocation4], %s1239
    %v1241 = vld [vmem:[%s1240] sm:$0x1]
    %v1242 = vmax.f32 %v1241, 0.0
    %v1243 = vsel %vm100, %v1242, %v1151
    %v1245 = vsel %vm102, %v1243, 0
    %1247 = vmatprep.subr.mxu0 0.0
    %1248 = vmatpush1.msra.mxu0 0.0
    %1249 = vmatprep.subr.mxu0 0.0
    %1250 = vmatpush1.msra.mxu0 0.0
    %1251 = vmatprep.subr.mxu0 0.0
    %1252 = vmatpush1.msra.mxu0 0.0
    %1253 = vmatprep.subr.mxu0 0.0
    %1254 = vmatpush1.msra.mxu0 0.0
    %1255 = vmatprep.subr.mxu0 0.0
    %1256 = vmatpush1.msra.mxu0 0.0
    %1257 = vmatprep.subr.mxu0 0.0
    %1258 = vmatpush1.msra.mxu0 0.0
    %1259 = vmatprep.subr.mxu0 0.0
    %1260 = vmatpush1.msra.mxu0 0.0
    %1261 = vmatprep.subr.mxu0 0.0
    %1262 = vmatpush1.msra.mxu0 0.0
    %1263 = vmatprep.subr.mxu0 0.0
    %1264 = vmatpush1.msra.mxu0 %v80
    %1265 = vmatprep.subr.mxu0 0.0
    %1266 = vmatpush1.msra.mxu0 %v79
    %1267 = vmatprep.subr.mxu0 0.0
    %1268 = vmatpush1.msra.mxu0 %v78
    %1269 = vmatprep.subr.mxu0 0.0
    %1270 = vmatpush1.msra.mxu0 %v77
    %1271 = vmatprep.subr.mxu0 0.0
    %1272 = vmatpush1.msra.mxu0 %v76
    %1273 = vmatprep.subr.mxu0 0.0
    %1274 = vmatpush1.msra.mxu0 %v75
    %1275 = vmatprep.subr.mxu0 0.0
    %1276 = vmatpush1.msra.mxu0 %v74
    %1277 = vmatprep.subr.mxu0 0.0
    %1278 = vmatpush1.msra.mxu0 %v73
    %1279 = vmatprep.subr.mxu0 0.0
    %1280 = vmatpush2.msra.mxu0 0.0
    %1281 = vmatprep.subr.mxu0 0.0
    %1282 = vmatpush2.msra.mxu0 0.0
    %1283 = vmatprep.subr.mxu0 0.0
    %1284 = vmatpush2.msra.mxu0 0.0
    %1285 = vmatprep.subr.mxu0 0.0
    %1286 = vmatpush2.msra.mxu0 0.0
    %1287 = vmatprep.subr.mxu0 0.0
    %1288 = vmatpush2.msra.mxu0 0.0
    %1289 = vmatprep.subr.mxu0 0.0
    %1290 = vmatpush2.msra.mxu0 0.0
    %1291 = vmatprep.subr.mxu0 0.0
    %1292 = vmatpush2.msra.mxu0 0.0
    %1293 = vmatprep.subr.mxu0 0.0
    %1294 = vmatpush2.msra.mxu0 0.0
    %1295 = vmatprep.subr.mxu0 0.0
    %1296 = vmatpush2.msra.mxu0 0.0
    %1297 = vmatprep.subr.mxu0 0.0
    %1298 = vmatpush2.msra.mxu0 0.0
    %1299 = vmatprep.subr.mxu0 0.0
    %1300 = vmatpush2.msra.mxu0 0.0
    %1301 = vmatprep.subr.mxu0 0.0
    %1302 = vmatpush2.msra.mxu0 0.0
    %1303 = vmatprep.subr.mxu0 0.0
    %1304 = vmatpush2.msra.mxu0 0.0
    %1305 = vmatprep.subr.mxu0 0.0
    %1306 = vmatpush2.msra.mxu0 0.0
    %1307 = vmatprep.subr.mxu0 0.0
    %1308 = vmatpush2.msra.mxu0 0.0
    %1309 = vmatprep.subr.mxu0 0.0
    %1310 = vmatpush2.msra.mxu0 0.0
    %1311 = vmatprep.mubr.f32.mxu0 0.0
    %1312 = vmatmul.mubr.f32.gmra.mxu0 %v1245
    %v1313 = vpop.f32.mrf.mxu0
    %v1314 = vadd.f32 %v81, %v1313
    %v1315 = vpop.f32.mrf.mxu0
    %1316 = vdwg.mxu0
    %v1317 = vxor.u32 %v1314, 2147483648
    %v1318 = vmul.f32 %v1317, 1.442695
    %v1319 = vpow.pop %v1318
    %v1320 = vadd.f32 %v1319, 1.0
    %v1321 = vrcp.pop %v1320
    %v1322 = vmul.f32 1.0, %v1321
    %1324 = vrot.lane.b32.xlu0 %v1314, 32
    %v1325 = vpop.permute.xlu0 %1324
    %v1327 = vmul.f32 %v1322, %v1325
    %1329 = vrot.lane.b32.xlu0 %v1327, 64
    %v1330 = vpop.permute.xlu0 %1329
    %v1332 = vadd.f32 %v1314, %v1330
    %v1333 = vtanh.pop %v1332
    %v1334 = vsub.f32 1.0, %v1322
    %1336 = vrot.lane.b32.xlu0 %v1333, 96
    %v1337 = vpop.permute.xlu0 %1336
    %v1339 = vmul.f32 %v1334, %v1337
    %v1340 = vmul.f32 %v1322, %v1151
    %v1341 = vadd.f32 %v1339, %v1340
    %1343 = vrot.lane.b32.xlu0 %v1341, 96
    %v1344 = vpop.permute.xlu0 %1343
    %v1345 = vsel %vm100, %v1344, 0
    %1347 = vmatprep.subr.mxu0 0.0
    %1348 = vmatpush1.msra.mxu0 0.0
    %1349 = vmatprep.subr.mxu0 0.0
    %1350 = vmatpush1.msra.mxu0 0.0
    %1351 = vmatprep.subr.mxu0 0.0
    %1352 = vmatpush1.msra.mxu0 0.0
    %1353 = vmatprep.subr.mxu0 0.0
    %1354 = vmatpush1.msra.mxu0 0.0
    %1355 = vmatprep.subr.mxu0 0.0
    %1356 = vmatpush1.msra.mxu0 0.0
    %1357 = vmatprep.subr.mxu0 0.0
    %1358 = vmatpush1.msra.mxu0 0.0
    %1359 = vmatprep.subr.mxu0 0.0
    %1360 = vmatpush1.msra.mxu0 0.0
    %1361 = vmatprep.subr.mxu0 0.0
    %1362 = vmatpush1.msra.mxu0 0.0
    %1363 = vmatprep.subr.mxu0 0.0
    %1364 = vmatpush1.msra.mxu0 0.0
    %1365 = vmatprep.subr.mxu0 0.0
    %1366 = vmatpush1.msra.mxu0 0.0
    %1367 = vmatprep.subr.mxu0 0.0
    %1368 = vmatpush1.msra.mxu0 0.0
    %1369 = vmatprep.subr.mxu0 0.0
    %1370 = vmatpush1.msra.mxu0 0.0
    %1371 = vmatprep.subr.mxu0 0.0
    %1372 = vmatpush1.msra.mxu0 %v85
    %1373 = vmatprep.subr.mxu0 0.0
    %1374 = vmatpush1.msra.mxu0 %v84
    %1375 = vmatprep.subr.mxu0 0.0
    %1376 = vmatpush1.msra.mxu0 %v83
    %1377 = vmatprep.subr.mxu0 0.0
    %1378 = vmatpush1.msra.mxu0 %v82
    %1379 = vmatprep.subr.mxu0 0.0
    %1380 = vmatpush2.msra.mxu0 0.0
    %1381 = vmatprep.subr.mxu0 0.0
    %1382 = vmatpush2.msra.mxu0 0.0
    %1383 = vmatprep.subr.mxu0 0.0
    %1384 = vmatpush2.msra.mxu0 0.0
    %1385 = vmatprep.subr.mxu0 0.0
    %1386 = vmatpush2.msra.mxu0 0.0
    %1387 = vmatprep.subr.mxu0 0.0
    %1388 = vmatpush2.msra.mxu0 0.0
    %1389 = vmatprep.subr.mxu0 0.0
    %1390 = vmatpush2.msra.mxu0 0.0
    %1391 = vmatprep.subr.mxu0 0.0
    %1392 = vmatpush2.msra.mxu0 0.0
    %1393 = vmatprep.subr.mxu0 0.0
    %1394 = vmatpush2.msra.mxu0 0.0
    %1395 = vmatprep.subr.mxu0 0.0
    %1396 = vmatpush2.msra.mxu0 0.0
    %1397 = vmatprep.subr.mxu0 0.0
    %1398 = vmatpush2.msra.mxu0 0.0
    %1399 = vmatprep.subr.mxu0 0.0
    %1400 = vmatpush2.msra.mxu0 0.0
    %1401 = vmatprep.subr.mxu0 0.0
    %1402 = vmatpush2.msra.mxu0 0.0
    %1403 = vmatprep.subr.mxu0 0.0
    %1404 = vmatpush2.msra.mxu0 0.0
    %1405 = vmatprep.subr.mxu0 0.0
    %1406 = vmatpush2.msra.mxu0 0.0
    %1407 = vmatprep.subr.mxu0 0.0
    %1408 = vmatpush2.msra.mxu0 0.0
    %1409 = vmatprep.subr.mxu0 0.0
    %1410 = vmatpush2.msra.mxu0 0.0
    %1411 = vmatprep.mubr.f32.mxu0 0.0
    %1412 = vmatmul.mubr.f32.gmra.mxu0 %v1345
    %v1413 = vpop.f32.mrf.mxu0
    %v1414 = vadd.f32 %v86, %v1413
    %v1415 = vpop.f32.mrf.mxu0
    %1416 = vdwg.mxu0
    %v1417 = vsel %vm276, %v1414, -inf
    %1418 = vmax.xlane.f32.xlu0 %v1417
    %v1419 = vpop.xlane.xlu0 %1418
    %v1420 = vsub.f32 %v1414, %v1419
    %v1421 = vmul.f32 %v1420, 1.442695
    %v1422 = vpow.pop %v1421
    %v1423 = vsel %vm276, %v1422, 0.0
    %1424 = vadd.xlane.f32.xlu0 %v1423
    %v1425 = vpop.xlane.xlu0 %1424
    %v1426 = vlog2.pop %v1425
    %v1427 = vmul.f32 %v1426, 0.6931472
    %v1428 = vsub.f32 %v1420, %v1427
    %s1429 = sld [smem:[#allocation3 + $0x7]]
    %s1430 = scalar_lea.vmem [#allocation4], %s1429
    %v1431 = vld [vmem:[%s1430] sm:$0x1]
    %v1432 = vmax.f32 %v1431, 0.0
    %v1433 = vsel %vm100, %v1432, %v1341
    %v1435 = vsel %vm102, %v1433, 0
    %1437 = vmatprep.subr.mxu0 0.0
    %1438 = vmatpush1.msra.mxu0 0.0
    %1439 = vmatprep.subr.mxu0 0.0
    %1440 = vmatpush1.msra.mxu0 0.0
    %1441 = vmatprep.subr.mxu0 0.0
    %1442 = vmatpush1.msra.mxu0 0.0
    %1443 = vmatprep.subr.mxu0 0.0
    %1444 = vmatpush1.msra.mxu0 0.0
    %1445 = vmatprep.subr.mxu0 0.0
    %1446 = vmatpush1.msra.mxu0 0.0
    %1447 = vmatprep.subr.mxu0 0.0
    %1448 = vmatpush1.msra.mxu0 0.0
    %1449 = vmatprep.subr.mxu0 0.0
    %1450 = vmatpush1.msra.mxu0 0.0
    %1451 = vmatprep.subr.mxu0 0.0
    %1452 = vmatpush1.msra.mxu0 0.0
    %1453 = vmatprep.subr.mxu0 0.0
    %1454 = vmatpush1.msra.mxu0 %v80
    %1455 = vmatprep.subr.mxu0 0.0
    %1456 = vmatpush1.msra.mxu0 %v79
    %1457 = vmatprep.subr.mxu0 0.0
    %1458 = vmatpush1.msra.mxu0 %v78
    %1459 = vmatprep.subr.mxu0 0.0
    %1460 = vmatpush1.msra.mxu0 %v77
    %1461 = vmatprep.subr.mxu0 0.0
    %1462 = vmatpush1.msra.mxu0 %v76
    %1463 = vmatprep.subr.mxu0 0.0
    %1464 = vmatpush1.msra.mxu0 %v75
    %1465 = vmatprep.subr.mxu0 0.0
    %1466 = vmatpush1.msra.mxu0 %v74
    %1467 = vmatprep.subr.mxu0 0.0
    %1468 = vmatpush1.msra.mxu0 %v73
    %1469 = vmatprep.subr.mxu0 0.0
    %1470 = vmatpush2.msra.mxu0 0.0
    %1471 = vmatprep.subr.mxu0 0.0
    %1472 = vmatpush2.msra.mxu0 0.0
    %1473 = vmatprep.subr.mxu0 0.0
    %1474 = vmatpush2.msra.mxu0 0.0
    %1475 = vmatprep.subr.mxu0 0.0
    %1476 = vmatpush2.msra.mxu0 0.0
    %1477 = vmatprep.subr.mxu0 0.0
    %1478 = vmatpush2.msra.mxu0 0.0
    %1479 = vmatprep.subr.mxu0 0.0
    %1480 = vmatpush2.msra.mxu0 0.0
    %1481 = vmatprep.subr.mxu0 0.0
    %1482 = vmatpush2.msra.mxu0 0.0
    %1483 = vmatprep.subr.mxu0 0.0
    %1484 = vmatpush2.msra.mxu0 0.0
    %1485 = vmatprep.subr.mxu0 0.0
    %1486 = vmatpush2.msra.mxu0 0.0
    %1487 = vmatprep.subr.mxu0 0.0
    %1488 = vmatpush2.msra.mxu0 0.0
    %1489 = vmatprep.subr.mxu0 0.0
    %1490 = vmatpush2.msra.mxu0 0.0
    %1491 = vmatprep.subr.mxu0 0.0
    %1492 = vmatpush2.msra.mxu0 0.0
    %1493 = vmatprep.subr.mxu0 0.0
    %1494 = vmatpush2.msra.mxu0 0.0
    %1495 = vmatprep.subr.mxu0 0.0
    %1496 = vmatpush2.msra.mxu0 0.0
    %1497 = vmatprep.subr.mxu0 0.0
    %1498 = vmatpush2.msra.mxu0 0.0
    %1499 = vmatprep.subr.mxu0 0.0
    %1500 = vmatpush2.msra.mxu0 0.0
    %1501 = vmatprep.mubr.f32.mxu0 0.0
    %1502 = vmatmul.mubr.f32.gmra.mxu0 %v1435
    %v1503 = vpop.f32.mrf.mxu0
    %v1504 = vadd.f32 %v81, %v1503
    %v1505 = vpop.f32.mrf.mxu0
    %1506 = vdwg.mxu0
    %v1507 = vxor.u32 %v1504, 2147483648
    %v1508 = vmul.f32 %v1507, 1.442695
    %v1509 = vpow.pop %v1508
    %v1510 = vadd.f32 %v1509, 1.0
    %v1511 = vrcp.pop %v1510
    %v1512 = vmul.f32 1.0, %v1511
    %1514 = vrot.lane.b32.xlu0 %v1504, 32
    %v1515 = vpop.permute.xlu0 %1514
    %v1517 = vmul.f32 %v1512, %v1515
    %1519 = vrot.lane.b32.xlu0 %v1517, 64
    %v1520 = vpop.permute.xlu0 %1519
    %v1522 = vadd.f32 %v1504, %v1520
    %v1523 = vtanh.pop %v1522
    %v1524 = vsub.f32 1.0, %v1512
    %1526 = vrot.lane.b32.xlu0 %v1523, 96
    %v1527 = vpop.permute.xlu0 %1526
    %v1529 = vmul.f32 %v1524, %v1527
    %v1530 = vmul.f32 %v1512, %v1341
    %v1531 = vadd.f32 %v1529, %v1530
    %1533 = vrot.lane.b32.xlu0 %v1531, 96
    %v1534 = vpop.permute.xlu0 %1533
    %v1535 = vsel %vm100, %v1534, 0
    %1537 = vmatprep.subr.mxu0 0.0
    %1538 = vmatpush1.msra.mxu0 0.0
    %1539 = vmatprep.subr.mxu0 0.0
    %1540 = vmatpush1.msra.mxu0 0.0
    %1541 = vmatprep.subr.mxu0 0.0
    %1542 = vmatpush1.msra.mxu0 0.0
    %1543 = vmatprep.subr.mxu0 0.0
    %1544 = vmatpush1.msra.mxu0 0.0
    %1545 = vmatprep.subr.mxu0 0.0
    %1546 = vmatpush1.msra.mxu0 0.0
    %1547 = vmatprep.subr.mxu0 0.0
    %1548 = vmatpush1.msra.mxu0 0.0
    %1549 = vmatprep.subr.mxu0 0.0
    %1550 = vmatpush1.msra.mxu0 0.0
    %1551 = vmatprep.subr.mxu0 0.0
    %1552 = vmatpush1.msra.mxu0 0.0
    %1553 = vmatprep.subr.mxu0 0.0
    %1554 = vmatpush1.msra.mxu0 0.0
    %1555 = vmatprep.subr.mxu0 0.0
    %1556 = vmatpush1.msra.mxu0 0.0
    %1557 = vmatprep.subr.mxu0 0.0
    %1558 = vmatpush1.msra.mxu0 0.0
    %1559 = vmatprep.subr.mxu0 0.0
    %1560 = vmatpush1.msra.mxu0 0.0
    %1561 = vmatprep.subr.mxu0 0.0
    %1562 = vmatpush1.msra.mxu0 %v85
    %1563 = vmatprep.subr.mxu0 0.0
    %1564 = vmatpush1.msra.mxu0 %v84
    %1565 = vmatprep.subr.mxu0 0.0
    %1566 = vmatpush1.msra.mxu0 %v83
    %1567 = vmatprep.subr.mxu0 0.0
    %1568 = vmatpush1.msra.mxu0 %v82
    %1569 = vmatprep.subr.mxu0 0.0
    %1570 = vmatpush2.msra.mxu0 0.0
    %1571 = vmatprep.subr.mxu0 0.0
    %1572 = vmatpush2.msra.mxu0 0.0
    %1573 = vmatprep.subr.mxu0 0.0
    %1574 = vmatpush2.msra.mxu0 0.0
    %1575 = vmatprep.subr.mxu0 0.0
    %1576 = vmatpush2.msra.mxu0 0.0
    %1577 = vmatprep.subr.mxu0 0.0
    %1578 = vmatpush2.msra.mxu0 0.0
    %1579 = vmatprep.subr.mxu0 0.0
    %1580 = vmatpush2.msra.mxu0 0.0
    %1581 = vmatprep.subr.mxu0 0.0
    %1582 = vmatpush2.msra.mxu0 0.0
    %1583 = vmatprep.subr.mxu0 0.0
    %1584 = vmatpush2.msra.mxu0 0.0
    %1585 = vmatprep.subr.mxu0 0.0
    %1586 = vmatpush2.msra.mxu0 0.0
    %1587 = vmatprep.subr.mxu0 0.0
    %1588 = vmatpush2.msra.mxu0 0.0
    %1589 = vmatprep.subr.mxu0 0.0
    %1590 = vmatpush2.msra.mxu0 0.0
    %1591 = vmatprep.subr.mxu0 0.0
    %1592 = vmatpush2.msra.mxu0 0.0
    %1593 = vmatprep.subr.mxu0 0.0
    %1594 = vmatpush2.msra.mxu0 0.0
    %1595 = vmatprep.subr.mxu0 0.0
    %1596 = vmatpush2.msra.mxu0 0.0
    %1597 = vmatprep.subr.mxu0 0.0
    %1598 = vmatpush2.msra.mxu0 0.0
    %1599 = vmatprep.subr.mxu0 0.0
    %1600 = vmatpush2.msra.mxu0 0.0
    %1601 = vmatprep.mubr.f32.mxu0 0.0
    %1602 = vmatmul.mubr.f32.gmra.mxu0 %v1535
    %v1603 = vpop.f32.mrf.mxu0
    %v1604 = vadd.f32 %v86, %v1603
    %v1605 = vpop.f32.mrf.mxu0
    %1606 = vdwg.mxu0
    %v1607 = vsel %vm276, %v1604, -inf
    %1608 = vmax.xlane.f32.xlu0 %v1607
    %v1609 = vpop.xlane.xlu0 %1608
    %v1610 = vsub.f32 %v1604, %v1609
    %v1611 = vmul.f32 %v1610, 1.442695
    %v1612 = vpow.pop %v1611
    %v1613 = vsel %vm276, %v1612, 0.0
    %1614 = vadd.xlane.f32.xlu0 %v1613
    %v1615 = vpop.xlane.xlu0 %1614
    %v1616 = vlog2.pop %v1615
    %v1617 = vmul.f32 %v1616, 0.6931472
    %v1618 = vsub.f32 %v1610, %v1617
    %v1620 = vrot.slane %v478, 7
    %v1623 = vrot.slane %v668, 6
    %v1626 = vrot.slane %v858, 5
    %v1629 = vrot.slane %v1048, 4
    %v1632 = vrot.slane %v1238, 3
    %v1635 = vrot.slane %v1428, 2
    %v1638 = vrot.slane %v1618, 1
    %v1640 = vsel %vm276, %v288, %v1620
    %vm1641 = vcmask 1041408
    %v1642 = vsel %vm1641, %v1640, %v1623
    %vm1643 = vcmask 1042432
    %v1644 = vsel %vm1643, %v1642, %v1626
    %vm1645 = vcmask 1043456
    %v1646 = vsel %vm1645, %v1644, %v1629
    %vm1647 = vcmask 1044480
    %v1648 = vsel %vm1647, %v1646, %v1632
    %vm1649 = vcmask 1045504
    %v1650 = vsel %vm1649, %v1648, %v1635
    %vm1651 = vcmask 1046528
    %v1652 = vsel %vm1651, %v1650, %v1638
    %1653 = vst [vmem:[#allocation10] sm:$0xff] %v1652
    %vm1655 = vcmask 253952
    %1656 = vst.msk [vmem:[#allocation11] sm:$0x1] %vm1655, %v1534
    // Predicated region
    $region38: #{tpu_custom_call.1} parent=1 // pred_check
      _
    $region39: #{tpu_custom_call.1} parent=1 // pred_check_branch
      %1658 = sbr.rel (0) target = $region41
    $region40: #{tpu_custom_call.1} parent=1 // pred_region
      %s1660 = ssub.s32 128, 128
      %1661 = vsyncadd [#allocation6], %s1660
      %s1663 = sshll.u32 [#allocation10], 4
      %s1664 = int_to_ptr.vmem [resolvable:$true] %s1663
      %1666 = dma.vmem_to_hbm [thread:$0]  %s1664, 128, %s7, [#allocation6]
    $region41: #{tpu_custom_call.1} parent=1 // pred_fallthru
      _
    // Predicated region
    $region42: #{tpu_custom_call.1} parent=1 // pred_check
      _
    $region43: #{tpu_custom_call.1} parent=1 // pred_check_branch
      %1668 = sbr.rel (0) target = $region45
    $region44: #{tpu_custom_call.1} parent=1 // pred_region
      %s1670 = ssub.s32 16, 16
      %1671 = vsyncadd [#allocation12], %s1670
      %s1673 = sshll.u32 [#allocation11], 4
      %s1674 = int_to_ptr.vmem [resolvable:$true] %s1673
      %1676 = dma.vmem_to_hbm [thread:$0]  %s1674, 16, %s8, [#allocation12]
    $region45: #{tpu_custom_call.1} parent=1 // pred_fallthru
      _
    // Predicated region
    $region46: #{tpu_custom_call.1} parent=1 // pred_check
      _
    $region47: #{tpu_custom_call.1} parent=1 // pred_check_branch
      %1678 = sbr.rel (0) target = $region49
    $region48: #{tpu_custom_call.1} parent=1 // pred_region
      %1679 = dma.done [#allocation6], 128
    $region49: #{tpu_custom_call.1} parent=1 // pred_fallthru
      _
    // Predicated region
    $region50: #{tpu_custom_call.1} parent=1 // pred_check
      _
    $region51: #{tpu_custom_call.1} parent=1 // pred_check_branch
      %1681 = sbr.rel (0) target = $region53
    $region52: #{tpu_custom_call.1} parent=1 // pred_region
      %1682 = dma.done [#allocation12], 16
    $region53: #{tpu_custom_call.1} parent=1 // pred_fallthru
      _
    %1683 = vsyncpa [#allocation5], 1
    %1684 = vsyncpa [#allocation8], 1
    %1685 = vsyncpa [#allocation6], 1
    %1686 = vsyncpa [#allocation12], 1

</llo_original>
